<compile_context>
chip_gen: v6e
topology: v6e:2x2x1
jax: 0.10.0
libtpu: 0.0.40
codegen_flags: <defaults>
</compile_context>

<pallas_src>
import functools

import jax
import jax.numpy as jnp
import numpy as np
from jax.experimental import pallas as pl
from jax.experimental.pallas import tpu as pltpu


def _gelu_tanh(x):
    # tanh-approximation of GELU; the tanh goes to the (otherwise idle) EUP.
    c = 0.7978845608028654  # sqrt(2/pi)
    return 0.5 * x * (1.0 + jnp.tanh(c * (x + 0.044715 * x * x * x)))


def visual_stream_kernel(p_ref, w1_ref, b1_ref, w2_ref, b2_ref, wfc_ref, bfc_ref,
                         out_ref, *, TB, Hp, Wp, C1, C2):
    # p_ref:   (1, 4*TB*Hp, Wp*9*Cin) bf16  conv1 im2col patches, rows ordered
    #                                       (h%2, w%2, img, h//2), lanes merged (w//2, 9*Cin)
    # w1_ref:  (Wp*9*Cin, Wp*C1)      bf16  block-diagonal conv1 weight
    # b1_ref:  (1, Wp*C1)             f32   conv1 bias tiled over w-positions
    # w2_ref:  (9*Wp*C1, Wp*C2)       bf16  per-tap block-diagonal conv2 weights, stacked
    # b2_ref:  (1, Wp*C2)             f32
    # wfc_ref: (Wp*C2, F)             bf16  FC weight tiled over w-positions, / (Hp*Wp)
    #                                       (global average pool folded into the FC matmul)
    # bfc_ref: (1, F)                 f32
    # out_ref: (1, TB, F)             f32
    n = TB * Hp

    # ---- conv1 + bias + GELU: ONE matmul, no in-kernel data prep ----
    y1 = jnp.dot(p_ref[0], w1_ref[...], preferred_element_type=jnp.float32)   # (4n, Wp*C1)
    y1 = _gelu_tanh(y1 + b1_ref[...])

    # ---- 2x2 max pool: the 4 pooling partners live in 4 contiguous row blocks ----
    pooled = jnp.maximum(jnp.maximum(y1[0:n], y1[n:2 * n]),
                         jnp.maximum(y1[2 * n:3 * n], y1[3 * n:4 * n]))        # (n, Wp*C1)

    # ---- zero-pad for conv2 "same" padding (values only, no scratch / no cross-step state) ----
    pm = pooled.reshape(TB, Hp, Wp * C1)                                       # lanes = (wp, c1)
    zw = jnp.zeros((TB, Hp, C1), jnp.float32)
    pm = jnp.concatenate([zw, pm, zw], axis=2)                                 # (TB, Hp,   (Wp+2)*C1)
    zh = jnp.zeros((TB, 1, (Wp + 2) * C1), jnp.float32)
    pm = jnp.concatenate([zh, pm, zh], axis=1)                                 # (TB, Hp+2, (Wp+2)*C1)

    # ---- conv2 + bias + GELU: 9 taps concatenated along (128-aligned) lanes -> ONE matmul ----
    taps = []
    for kh in range(3):
        for kw in range(3):
            taps.append(pm[:, kh:kh + Hp, kw * C1:(kw + Wp) * C1])             # (TB, Hp, Wp*C1)
    pat2 = jnp.concatenate(taps, axis=2).reshape(TB * Hp, 9 * Wp * C1)
    y2 = jnp.dot(pat2.astype(jnp.bfloat16), w2_ref[...],
                 preferred_element_type=jnp.float32)                           # (n, Wp*C2)
    y2 = _gelu_tanh(y2 + b2_ref[...])

    # ---- global average pool + FC: sum over h, fold the w-sum/scale into the FC weight ----
    s = jnp.sum(y2.reshape(TB, Hp, Wp * C2), axis=1)                           # (TB, Wp*C2)
    out = jnp.dot(s.astype(jnp.bfloat16), wfc_ref[...],
                  preferred_element_type=jnp.float32)
    out_ref[0] = out + bfc_ref[...]                                            # (TB, F), lane-dense


def _choose_tb(B, Hp, Wp, Cin, C1, C2, F):
    """Images per grid step, derived from a VMEM budget (review items 1/2/10)."""
    def rup(x, m):
        return ((x + m - 1) // m) * m
    LANE = 128
    # fixed weight footprint (x2 for possible double buffering)
    fixed = 2 * (rup(Wp * 9 * Cin, 16) * rup(Wp * C1, LANE) * 2
                 + rup(9 * Wp * C1, 16) * rup(Wp * C2, LANE) * 2
                 + rup(Wp * C2, 16) * rup(F, LANE) * 2
                 + 8 * (rup(Wp * C1, LANE) + rup(Wp * C2, LANE) + rup(F, LANE)) * 4)
    # lane-padded per-image activation footprint
    per_img = (2 * 4 * Hp * rup(Wp * 9 * Cin, LANE) * 2       # conv1 patches (bf16, 2 buffers)
               + 3 * 4 * Hp * rup(Wp * C1, LANE) * 4          # y1 + GELU temporaries (f32)
               + (Hp + 10) * rup((Wp + 2) * C1, LANE) * 4     # pooled + zero-padded value
               + Hp * rup(9 * Wp * C1, LANE) * 2              # conv2 im2col (bf16)
               + 3 * Hp * rup(Wp * C2, LANE) * 4              # y2 + GELU temporaries (f32)
               + 4 * rup(F, LANE) * 4)                        # output block (2 buffers)
    per_img = int(per_img * 1.5)                              # headroom for compiler temps
    budget = 12 * 1024 * 1024 - fixed                         # fits v5e's 16 MiB default scope
    tb = max(1, min(B, budget // max(per_img, 1)))
    # keep >= ~8 grid steps when the batch allows it so the pipeline has work and the
    # v7x megacore (2 TCs) gets several steps per core (TB ~ B/8, not B/2).
    if B >= 8:
        tb = min(tb, max(1, B // 8))
    elif B >= 2:
        tb = min(tb, max(1, B // 2))
    return int(max(1, min(tb, 64)))


@functools.partial(jax.jit, static_argnames=("images_per_step",))
def visual_stream(x_nchw, params, images_per_step=None):
    w1, b1, w2, b2, wfc, bfc = params
    B, Cin, H, W = x_nchw.shape
    # TODO(synk): odd H/W (MaxPool2d floor semantics) not handled in this fused kernel.
    assert H % 2 == 0 and W % 2 == 0, "MaxPool2d(2) path assumes even H, W"
    C1 = w1.shape[-1]
    C2 = w2.shape[-1]
    F = wfc.shape[-1]
    Hp, Wp = H // 2, W // 2
    K1 = 9 * Cin
    f32 = jnp.float32

    TB = _choose_tb(B, Hp, Wp, Cin, C1, C2, F) if images_per_step is None else int(images_per_step)
    steps = -(-B // TB)
    Bp = steps * TB

    # ---- wrapper-side im2col for conv1 (all cheap XLA ops, fused under jit) ----
    xpad = jnp.transpose(x_nchw, (0, 2, 3, 1)).astype(f32)
    xpad = jnp.pad(xpad, ((0, Bp - B), (1, 1), (1, 1), (0, 0)))        # (Bp, H+2, W+2, Cin)
    taps = [xpad[:, kh:kh + H, kw:kw + W, :] for kh in range(3) for kw in range(3)]
    pat = jnp.concatenate(taps, axis=-1)                               # (Bp, H, W, 9*Cin)
    # rows ordered (step, h%2, w%2, img, h//2); lanes merged (w//2, 9*Cin)
    pat = pat.reshape(steps, TB, Hp, 2, Wp, 2, K1)
    pat = jnp.transpose(pat, (0, 3, 5, 1, 2, 4, 6))                    # (steps,2,2,TB,Hp,Wp,K1)
    pat = pat.reshape(steps, 4 * TB * Hp, Wp * K1).astype(jnp.bfloat16)

    # ---- merged-lane weights (block-diagonal over w-positions), bf16 for the MXU ----
    eye = jnp.eye(Wp, dtype=f32)
    w1bd = jnp.kron(eye, w1.astype(f32).reshape(K1, C1)).astype(jnp.bfloat16)      # (Wp*K1, Wp*C1)
    w2f = w2.astype(f32).reshape(9, C1, C2)
    w2bd = jnp.concatenate([jnp.kron(eye, w2f[t]) for t in range(9)], axis=0)      # (9*Wp*C1, Wp*C2)
    w2bd = w2bd.astype(jnp.bfloat16)
    # global-avg-pool folded into the FC weight: out = (sum_{h,w} y2) @ (tile(wfc)/ (Hp*Wp))
    wfcm = (jnp.tile(wfc.astype(f32), (Wp, 1)) / float(Hp * Wp)).astype(jnp.bfloat16)  # (Wp*C2, F)
    b1m = jnp.tile(b1.astype(f32), Wp).reshape(1, Wp * C1)
    b2m = jnp.tile(b2.astype(f32), Wp).reshape(1, Wp * C2)
    bfc2 = bfc.astype(f32).reshape(1, F)

    kern = functools.partial(visual_stream_kernel, TB=TB, Hp=Hp, Wp=Wp, C1=C1, C2=C2)
    out = pl.pallas_call(
        kern,
        out_shape=jax.ShapeDtypeStruct((steps, TB, F), f32),
        grid_spec=pltpu.PrefetchScalarGridSpec(
            num_scalar_prefetch=0,
            grid=(steps,),
            in_specs=[
                pl.BlockSpec((1, 4 * TB * Hp, Wp * K1), lambda b: (b, 0, 0)),
                pl.BlockSpec((Wp * K1, Wp * C1), lambda b: (0, 0)),
                pl.BlockSpec((1, Wp * C1), lambda b: (0, 0)),
                pl.BlockSpec((9 * Wp * C1, Wp * C2), lambda b: (0, 0)),
                pl.BlockSpec((1, Wp * C2), lambda b: (0, 0)),
                pl.BlockSpec((Wp * C2, F), lambda b: (0, 0)),
                pl.BlockSpec((1, F), lambda b: (0, 0)),
            ],
            out_specs=pl.BlockSpec((1, TB, F), lambda b: (b, 0, 0)),
        ),
        compiler_params=pltpu.CompilerParams(
            dimension_semantics=("parallel",),
            vmem_limit_bytes=32 * 1024 * 1024,
        ),
    )(pat, w1bd, b1m, w2bd, b2m, wfcm, bfc2)
    return out.reshape(Bp, F)[:B]


def reference_forward(x_nchw, params):
    """Pure-JAX reference matching the PyTorch forward (for validation)."""
    w1, b1, w2, b2, wfc, bfc = params
    w1_oihw = jnp.transpose(w1, (3, 2, 0, 1))
    w2_oihw = jnp.transpose(w2, (3, 2, 0, 1))
    hi = jax.lax.Precision.HIGHEST
    y = jax.lax.conv_general_dilated(
        x_nchw, w1_oihw, (1, 1), "SAME",
        dimension_numbers=("NCHW", "OIHW", "NCHW"), precision=hi)
    y = jax.nn.gelu(y + b1[None, :, None, None], approximate=False)
    y = jax.lax.reduce_window(y, -jnp.inf, jax.lax.max,
                              (1, 1, 2, 2), (1, 1, 2, 2), "VALID")
    y = jax.lax.conv_general_dilated(
        y, w2_oihw, (1, 1), "SAME",
        dimension_numbers=("NCHW", "OIHW", "NCHW"), precision=hi)
    y = jax.nn.gelu(y + b2[None, :, None, None], approximate=False)
    y = jnp.mean(y, axis=(2, 3))                                   # AdaptiveAvgPool2d((1,1)) + flatten
    return jnp.dot(y, wfc, precision=hi) + bfc[None, :]


if __name__ == "__main__":
    key = jax.random.PRNGKey(0)
    ks = jax.random.split(key, 7)

    # deterministic synthetic parameters (shapes from VisualStream.__init__),
    # conv weights in (kh, kw, cin, cout) layout, fc weight in (in, out) = torch weight.T
    w1 = jax.random.normal(ks[1], (3, 3, 3, 16), jnp.float32) * 0.2
    b1 = jax.random.normal(ks[2], (16,), jnp.float32) * 0.1
    w2 = jax.random.normal(ks[3], (3, 3, 16, 32), jnp.float32) * 0.1
    b2 = jax.random.normal(ks[4], (32,), jnp.float32) * 0.1
    wfc = jax.random.normal(ks[5], (32, 256), jnp.float32) * 0.1
    bfc = jax.random.normal(ks[6], (256,), jnp.float32) * 0.1
    params = (w1, b1, w2, b2, wfc, bfc)

    # input in PyTorch NCHW convention
    x = jax.random.normal(ks[0], (2, 3, 16, 16), jnp.float32)
    out = jax.block_until_ready(visual_stream(x, params))
    assert out.shape == (2, 256), out.shape
    ref = reference_forward(x, params)
    np.testing.assert_allclose(np.asarray(out), np.asarray(ref), rtol=2e-2, atol=2e-2)

    # exercise TB > 1 and batch padding (B=6, TB=4 -> 2 grid steps, 2 padded images dropped)
    x6 = jax.random.normal(jax.random.PRNGKey(1), (6, 3, 16, 16), jnp.float32)
    out6 = jax.block_until_ready(visual_stream(x6, params, images_per_step=4))
    ref6 = reference_forward(x6, params)
    np.testing.assert_allclose(np.asarray(out6), np.asarray(ref6), rtol=2e-2, atol=2e-2)

    print("KERNEL_OK")
</pallas_src>

<mosaic_0001>
module attributes {stable_mosaic.version = 11 : i64} {
  func.func @visual_stream_kernel(%arg0: i32, %arg1: memref<1x32x216xbf16, #tpu.memory_space<vmem>>, %arg2: memref<216x128xbf16, #tpu.memory_space<vmem>>, %arg3: memref<1x128xf32, #tpu.memory_space<vmem>>, %arg4: memref<1152x256xbf16, #tpu.memory_space<vmem>>, %arg5: memref<1x256xf32, #tpu.memory_space<vmem>>, %arg6: memref<256x256xbf16, #tpu.memory_space<vmem>>, %arg7: memref<1x256xf32, #tpu.memory_space<vmem>>, %arg8: memref<1x1x256xf32, #tpu.memory_space<vmem>>) attributes {dimension_semantics = [#tpu.dimension_semantics<parallel>], iteration_bounds = array<i64: 2>, scalar_prefetch = 0 : i64, scratch_operands = 0 : i64, tpu.core_type = #tpu.core_type<tc>, window_params = [{transform_indices = @transform_0, window_bounds = array<i64: 1, 32, 216>}, {pipeline_mode = #tpu.pipeline_mode<synchronous>, transform_indices = @transform_1, window_bounds = array<i64: 216, 128>}, {pipeline_mode = #tpu.pipeline_mode<synchronous>, transform_indices = @transform_2, window_bounds = array<i64: 1, 128>}, {pipeline_mode = #tpu.pipeline_mode<synchronous>, transform_indices = @transform_3, window_bounds = array<i64: 1152, 256>}, {pipeline_mode = #tpu.pipeline_mode<synchronous>, transform_indices = @transform_4, window_bounds = array<i64: 1, 256>}, {pipeline_mode = #tpu.pipeline_mode<synchronous>, transform_indices = @transform_5, window_bounds = array<i64: 256, 256>}, {pipeline_mode = #tpu.pipeline_mode<synchronous>, transform_indices = @transform_6, window_bounds = array<i64: 1, 256>}, {transform_indices = @transform_7, window_bounds = array<i64: 1, 1, 256>}]} {
    %c0 = arith.constant 0 : index
    %c0_0 = arith.constant 0 : index
    %c0_1 = arith.constant 0 : index
    %0 = vector.load %arg1[%c0, %c0_0, %c0_1] : memref<1x32x216xbf16, #tpu.memory_space<vmem>>, vector<1x32x216xbf16>
    %1 = vector.shape_cast %0 : vector<1x32x216xbf16> to vector<32x216xbf16>
    %c0_2 = arith.constant 0 : index
    %c0_3 = arith.constant 0 : index
    %2 = vector.load %arg2[%c0_2, %c0_3] : memref<216x128xbf16, #tpu.memory_space<vmem>>, vector<216x128xbf16>
    %cst = arith.constant dense<0.000000e+00> : vector<32x128xf32>
    %3 = tpu.matmul %1, %2, %cst {dimension_numbers = #tpu.dot_dimension_numbers<[1], [0], [0], [1], [0, 0, 1, 1], [], []>} : vector<32x216xbf16>, vector<216x128xbf16>, vector<32x128xf32> -> vector<32x128xf32>
    %c0_4 = arith.constant 0 : index
    %c0_5 = arith.constant 0 : index
    %4 = vector.load %arg3[%c0_4, %c0_5] : memref<1x128xf32, #tpu.memory_space<vmem>>, vector<1x128xf32>
    %5 = vector.broadcast %4 : vector<1x128xf32> to vector<32x128xf32>
    %6 = arith.addf %3, %5 : vector<32x128xf32>
    %cst_6 = arith.constant 5.000000e-01 : f32
    %7 = vector.broadcast %cst_6 : f32 to vector<32x128xf32>
    %8 = arith.mulf %7, %6 : vector<32x128xf32>
    %cst_7 = arith.constant 4.471500e-02 : f32
    %9 = vector.broadcast %cst_7 : f32 to vector<32x128xf32>
    %10 = arith.mulf %9, %6 : vector<32x128xf32>
    %11 = arith.mulf %10, %6 : vector<32x128xf32>
    %12 = arith.mulf %11, %6 : vector<32x128xf32>
    %13 = arith.addf %6, %12 : vector<32x128xf32>
    %cst_8 = arith.constant 0.797884583 : f32
    %14 = vector.broadcast %cst_8 : f32 to vector<32x128xf32>
    %15 = arith.mulf %14, %13 : vector<32x128xf32>
    %16 = math.tanh %15 : vector<32x128xf32>
    %cst_9 = arith.constant 1.000000e+00 : f32
    %17 = vector.broadcast %cst_9 : f32 to vector<32x128xf32>
    %18 = arith.addf %17, %16 : vector<32x128xf32>
    %19 = arith.mulf %8, %18 : vector<32x128xf32>
    %20 = vector.extract_strided_slice %19 {offsets = [0, 0], sizes = [8, 128], strides = [1, 1]} : vector<32x128xf32> to vector<8x128xf32>
    %21 = vector.extract_strided_slice %19 {offsets = [8, 0], sizes = [8, 128], strides = [1, 1]} : vector<32x128xf32> to vector<8x128xf32>
    %22 = arith.maximumf %20, %21 : vector<8x128xf32>
    %23 = vector.extract_strided_slice %19 {offsets = [16, 0], sizes = [8, 128], strides = [1, 1]} : vector<32x128xf32> to vector<8x128xf32>
    %24 = vector.extract_strided_slice %19 {offsets = [24, 0], sizes = [8, 128], strides = [1, 1]} : vector<32x128xf32> to vector<8x128xf32>
    %25 = arith.maximumf %23, %24 : vector<8x128xf32>
    %26 = arith.maximumf %22, %25 : vector<8x128xf32>
    %27 = vector.shape_cast %26 : vector<8x128xf32> to vector<1x8x128xf32>
    %cst_10 = arith.constant 0.000000e+00 : f32
    %28 = vector.broadcast %cst_10 : f32 to vector<1x8x16xf32>
    %29 = tpu.concatenate %28, %27, %28 in 2 : vector<1x8x16xf32>, vector<1x8x128xf32>, vector<1x8x16xf32> -> vector<1x8x160xf32>
    %cst_11 = arith.constant 0.000000e+00 : f32
    %30 = vector.broadcast %cst_11 : f32 to vector<1x1x160xf32>
    %31 = tpu.concatenate %30, %29, %30 in 1 : vector<1x1x160xf32>, vector<1x8x160xf32>, vector<1x1x160xf32> -> vector<1x10x160xf32>
    %32 = vector.extract_strided_slice %31 {offsets = [0, 0, 0], sizes = [1, 8, 128], strides = [1, 1, 1]} : vector<1x10x160xf32> to vector<1x8x128xf32>
    %33 = vector.extract_strided_slice %31 {offsets = [0, 0, 16], sizes = [1, 8, 128], strides = [1, 1, 1]} : vector<1x10x160xf32> to vector<1x8x128xf32>
    %34 = vector.extract_strided_slice %31 {offsets = [0, 0, 32], sizes = [1, 8, 128], strides = [1, 1, 1]} : vector<1x10x160xf32> to vector<1x8x128xf32>
    %35 = vector.extract_strided_slice %31 {offsets = [0, 1, 0], sizes = [1, 8, 128], strides = [1, 1, 1]} : vector<1x10x160xf32> to vector<1x8x128xf32>
    %36 = vector.extract_strided_slice %31 {offsets = [0, 1, 16], sizes = [1, 8, 128], strides = [1, 1, 1]} : vector<1x10x160xf32> to vector<1x8x128xf32>
    %37 = vector.extract_strided_slice %31 {offsets = [0, 1, 32], sizes = [1, 8, 128], strides = [1, 1, 1]} : vector<1x10x160xf32> to vector<1x8x128xf32>
    %38 = vector.extract_strided_slice %31 {offsets = [0, 2, 0], sizes = [1, 8, 128], strides = [1, 1, 1]} : vector<1x10x160xf32> to vector<1x8x128xf32>
    %39 = vector.extract_strided_slice %31 {offsets = [0, 2, 16], sizes = [1, 8, 128], strides = [1, 1, 1]} : vector<1x10x160xf32> to vector<1x8x128xf32>
    %40 = vector.extract_strided_slice %31 {offsets = [0, 2, 32], sizes = [1, 8, 128], strides = [1, 1, 1]} : vector<1x10x160xf32> to vector<1x8x128xf32>
    %41 = tpu.concatenate %32, %33, %34, %35, %36, %37, %38, %39, %40 in 2 : vector<1x8x128xf32>, vector<1x8x128xf32>, vector<1x8x128xf32>, vector<1x8x128xf32>, vector<1x8x128xf32>, vector<1x8x128xf32>, vector<1x8x128xf32>, vector<1x8x128xf32>, vector<1x8x128xf32> -> vector<1x8x1152xf32>
    %42 = vector.shape_cast %41 : vector<1x8x1152xf32> to vector<8x1152xf32>
    %43 = arith.truncf %42 : vector<8x1152xf32> to vector<8x1152xbf16>
    %c0_12 = arith.constant 0 : index
    %c0_13 = arith.constant 0 : index
    %44 = vector.load %arg4[%c0_12, %c0_13] : memref<1152x256xbf16, #tpu.memory_space<vmem>>, vector<1152x256xbf16>
    %cst_14 = arith.constant dense<0.000000e+00> : vector<8x256xf32>
    %45 = tpu.matmul %43, %44, %cst_14 {dimension_numbers = #tpu.dot_dimension_numbers<[1], [0], [0], [1], [0, 0, 1, 1], [], []>} : vector<8x1152xbf16>, vector<1152x256xbf16>, vector<8x256xf32> -> vector<8x256xf32>
    %c0_15 = arith.constant 0 : index
    %c0_16 = arith.constant 0 : index
    %46 = vector.load %arg5[%c0_15, %c0_16] : memref<1x256xf32, #tpu.memory_space<vmem>>, vector<1x256xf32>
    %47 = vector.broadcast %46 : vector<1x256xf32> to vector<8x256xf32>
    %48 = arith.addf %45, %47 : vector<8x256xf32>
    %cst_17 = arith.constant 5.000000e-01 : f32
    %49 = vector.broadcast %cst_17 : f32 to vector<8x256xf32>
    %50 = arith.mulf %49, %48 : vector<8x256xf32>
    %cst_18 = arith.constant 4.471500e-02 : f32
    %51 = vector.broadcast %cst_18 : f32 to vector<8x256xf32>
    %52 = arith.mulf %51, %48 : vector<8x256xf32>
    %53 = arith.mulf %52, %48 : vector<8x256xf32>
    %54 = arith.mulf %53, %48 : vector<8x256xf32>
    %55 = arith.addf %48, %54 : vector<8x256xf32>
    %cst_19 = arith.constant 0.797884583 : f32
    %56 = vector.broadcast %cst_19 : f32 to vector<8x256xf32>
    %57 = arith.mulf %56, %55 : vector<8x256xf32>
    %58 = math.tanh %57 : vector<8x256xf32>
    %cst_20 = arith.constant 1.000000e+00 : f32
    %59 = vector.broadcast %cst_20 : f32 to vector<8x256xf32>
    %60 = arith.addf %59, %58 : vector<8x256xf32>
    %61 = arith.mulf %50, %60 : vector<8x256xf32>
    %62 = vector.shape_cast %61 : vector<8x256xf32> to vector<1x8x256xf32>
    %cst_21 = arith.constant dense<0.000000e+00> : vector<1x256xf32>
    %63 = vector.multi_reduction <add>, %62, %cst_21 [1] : vector<1x8x256xf32> to vector<1x256xf32>
    %64 = arith.truncf %63 : vector<1x256xf32> to vector<1x256xbf16>
    %c0_22 = arith.constant 0 : index
    %c0_23 = arith.constant 0 : index
    %65 = vector.load %arg6[%c0_22, %c0_23] : memref<256x256xbf16, #tpu.memory_space<vmem>>, vector<256x256xbf16>
    %cst_24 = arith.constant dense<0.000000e+00> : vector<1x256xf32>
    %66 = tpu.matmul %64, %65, %cst_24 {dimension_numbers = #tpu.dot_dimension_numbers<[1], [0], [0], [1], [0, 0, 1, 1], [], []>} : vector<1x256xbf16>, vector<256x256xbf16>, vector<1x256xf32> -> vector<1x256xf32>
    %c0_25 = arith.constant 0 : index
    %c0_26 = arith.constant 0 : index
    %67 = vector.load %arg7[%c0_25, %c0_26] : memref<1x256xf32, #tpu.memory_space<vmem>>, vector<1x256xf32>
    %68 = arith.addf %66, %67 : vector<1x256xf32>
    %c0_27 = arith.constant 0 : index
    %c0_28 = arith.constant 0 : index
    %c0_29 = arith.constant 0 : index
    %69 = vector.load %arg8[%c0_27, %c0_28, %c0_29] : memref<1x1x256xf32, #tpu.memory_space<vmem>>, vector<1x1x256xf32>
    %70 = vector.shape_cast %69 : vector<1x1x256xf32> to vector<1x256xf32>
    %71 = vector.shape_cast %68 : vector<1x256xf32> to vector<1x1x256xf32>
    tpu.vector_store %arg8[%c0_27, %c0_28, %c0_29], %71 {strides = array<i32>} : memref<1x1x256xf32, #tpu.memory_space<vmem>>, vector<1x1x256xf32>,
    return
  }
  func.func @transform_0(%arg0: i32) -> (i32, i32, i32) {
    %c0_i32 = arith.constant 0 : i32
    %c0_i32_0 = arith.constant 0 : i32
    %c0_i32_1 = arith.constant 0 : i32
    return %arg0, %c0_i32, %c0_i32_0 : i32, i32, i32
  }
  func.func @transform_1(%arg0: i32) -> (i32, i32) {
    %c0_i32 = arith.constant 0 : i32
    %c0_i32_0 = arith.constant 0 : i32
    %c0_i32_1 = arith.constant 0 : i32
    return %c0_i32, %c0_i32_0 : i32, i32
  }
  func.func @transform_2(%arg0: i32) -> (i32, i32) {
    %c0_i32 = arith.constant 0 : i32
    %c0_i32_0 = arith.constant 0 : i32
    %c0_i32_1 = arith.constant 0 : i32
    return %c0_i32, %c0_i32_0 : i32, i32
  }
  func.func @transform_3(%arg0: i32) -> (i32, i32) {
    %c0_i32 = arith.constant 0 : i32
    %c0_i32_0 = arith.constant 0 : i32
    %c0_i32_1 = arith.constant 0 : i32
    return %c0_i32, %c0_i32_0 : i32, i32
  }
  func.func @transform_4(%arg0: i32) -> (i32, i32) {
    %c0_i32 = arith.constant 0 : i32
    %c0_i32_0 = arith.constant 0 : i32
    %c0_i32_1 = arith.constant 0 : i32
    return %c0_i32, %c0_i32_0 : i32, i32
  }
  func.func @transform_5(%arg0: i32) -> (i32, i32) {
    %c0_i32 = arith.constant 0 : i32
    %c0_i32_0 = arith.constant 0 : i32
    %c0_i32_1 = arith.constant 0 : i32
    return %c0_i32, %c0_i32_0 : i32, i32
  }
  func.func @transform_6(%arg0: i32) -> (i32, i32) {
    %c0_i32 = arith.constant 0 : i32
    %c0_i32_0 = arith.constant 0 : i32
    %c0_i32_1 = arith.constant 0 : i32
    return %c0_i32, %c0_i32_0 : i32, i32
  }
  func.func @transform_7(%arg0: i32) -> (i32, i32, i32) {
    %c0_i32 = arith.constant 0 : i32
    %c0_i32_0 = arith.constant 0 : i32
    %c0_i32_1 = arith.constant 0 : i32
    return %arg0, %c0_i32, %c0_i32_0 : i32, i32, i32
  }
}

</mosaic_0001>

<llo_original>
// kernel: tile.23
$region0: #{tile.23}
  #allocation0 [shape = 's32[1]{0}', space=sflag, size = 0x4, scoped, tag = 'scoped memory for tile.23']
  %s0 = inlined_call_operand.vmem [shape: f32[16], index: 0, kind: input, shape index: {}]
  %s1 = inlined_call_operand.vmem [shape: f32[8,16], index: 1, kind: output, shape index: {}]
  // Predicated region
  $region2: #{tile.23} parent=0 // pred_check
    _
  $region3: #{tile.23} parent=0 // pred_check_branch
    %3 = sbr.rel (0) target = $region5
  $region4: #{tile.23} parent=0 // pred_region
    _
  $region5: #{tile.23} parent=0 // pred_fallthru
    _
  %v4 = vld [vmem:[%s0] ss:$0 sm:$0xff]
  %5 = vst [vmem:[%s1] sm:$0xff] %v4

// kernel: tile.24
$region0: #{tile.24}
  %s0 = inlined_call_operand.vmem [shape: f32[8,16], index: 0, kind: input, shape index: {}]
  %s1 = inlined_call_operand.vmem [shape: f32[1,128], index: 1, kind: output, shape index: {}]
  $region1: #{tile.24} parent=0
    #allocation0 [shape = 'u8[4096]{0}', space=vmem, size = 0x1000, scoped, tag = 'scoped mem for output reshape']
    %v2 = vld [vmem:[%s0] sm:$0x1]
    %vm3 = vcmask 130048
    %4 = vst.msk [vmem:[#allocation0] sm:$0x1] %vm3, %v2
    %s5 = scalar_lea.vmem %s0, 7
    %v6 = vld [vmem:[%s5] sm:$0x1]
    %7 = vrot.lane.b32.xlu0 %v6, 112
    %v8 = vpop.permute.xlu0 %7
    %vm9 = vcmask 1048448
    %10 = vst.msk [vmem:[#allocation0] sm:$0x1] %vm9, %v8
    %s11 = scalar_lea.vmem %s0, 6
    %v12 = vld [vmem:[%s11] sm:$0x1]
    %13 = vrot.lane.b32.xlu0 %v12, 96
    %v14 = vpop.permute.xlu0 %13
    %vm15 = vcmask 917248
    %16 = vst.msk [vmem:[#allocation0] sm:$0x1] %vm15, %v14
    %s17 = scalar_lea.vmem %s0, 5
    %v18 = vld [vmem:[%s17] sm:$0x1]
    %19 = vrot.lane.b32.xlu0 %v18, 80
    %v20 = vpop.permute.xlu0 %19
    %vm21 = vcmask 786048
    %22 = vst.msk [vmem:[#allocation0] sm:$0x1] %vm21, %v20
    %s23 = scalar_lea.vmem %s0, 4
    %v24 = vld [vmem:[%s23] sm:$0x1]
    %25 = vrot.lane.b32.xlu0 %v24, 64
    %v26 = vpop.permute.xlu0 %25
    %vm27 = vcmask 654848
    %28 = vst.msk [vmem:[#allocation0] sm:$0x1] %vm27, %v26
    %s29 = scalar_lea.vmem %s0, 3
    %v30 = vld [vmem:[%s29] sm:$0x1]
    %31 = vrot.lane.b32.xlu0 %v30, 48
    %v32 = vpop.permute.xlu0 %31
    %vm33 = vcmask 523648
    %34 = vst.msk [vmem:[#allocation0] sm:$0x1] %vm33, %v32
    %s35 = scalar_lea.vmem %s0, 2
    %v36 = vld [vmem:[%s35] sm:$0x1]
    %37 = vrot.lane.b32.xlu0 %v36, 32
    %v38 = vpop.permute.xlu0 %37
    %vm39 = vcmask 392448
    %40 = vst.msk [vmem:[#allocation0] sm:$0x1] %vm39, %v38
    %s41 = scalar_lea.vmem %s0, 1
    %v42 = vld [vmem:[%s41] sm:$0x1]
    %43 = vrot.lane.b32.xlu0 %v42, 16
    %v44 = vpop.permute.xlu0 %43
    %vm45 = vcmask 261248
    %46 = vst.msk [vmem:[#allocation0] sm:$0x1] %vm45, %v44
    %s48 = sshll.u32 1, 1
    %s49 = ssub.s32 %s48, 1
    %v51 = vld [vmem:[#allocation0] sm:%s49]
    %s52 = sshll.u32 1, 1
    %s53 = ssub.s32 %s52, 1
    %54 = vst [vmem:[%s1] sm:%s53] %v51

// kernel: tile.28
$region0: #{tile.28}
  #allocation0 [shape = 's32[1]{0}', space=sflag, size = 0x4, scoped, tag = 'scoped memory for tile.28']
  %s0 = inlined_call_operand.vmem [shape: f32[32], index: 0, kind: input, shape index: {}]
  %s1 = inlined_call_operand.vmem [shape: f32[8,32], index: 1, kind: output, shape index: {}]
  // Predicated region
  $region2: #{tile.28} parent=0 // pred_check
    _
  $region3: #{tile.28} parent=0 // pred_check_branch
    %3 = sbr.rel (0) target = $region5
  $region4: #{tile.28} parent=0 // pred_region
    _
  $region5: #{tile.28} parent=0 // pred_fallthru
    _
  %v4 = vld [vmem:[%s0] ss:$0 sm:$0xff]
  %5 = vst [vmem:[%s1] sm:$0xff] %v4

// kernel: tile.29
$region0: #{tile.29}
  %s0 = inlined_call_operand.vmem [shape: f32[8,32], index: 0, kind: input, shape index: {}]
  %s1 = inlined_call_operand.vmem [shape: f32[1,256], index: 1, kind: output, shape index: {}]
  $region1: #{tile.29} parent=0
    #allocation0 [shape = 'u8[8192]{0}', space=vmem, size = 0x2000, scoped, tag = 'scoped mem for output reshape']
    %s2 = smov 3
    %v3 = vld [vmem:[%s0] ss:$4 sm:%s2]
    %vm4 = vcmask 261120
    %5 = vst.msk [vmem:[#allocation0] ss:$8 sm:$0x3] %vm4, %v3
    %s6 = scalar_lea.vmem %s0, 3
    %s7 = smov 3
    %v8 = vld [vmem:[%s6] ss:$4 sm:%s7]
    %9 = vrot.lane.b32.xlu0 %v8, 96
    %v10 = vpop.permute.xlu0 %9
    %vm11 = vcmask 1048320
    %12 = vst.msk [vmem:[#allocation0] ss:$8 sm:$0x3] %vm11, %v10
    %s13 = scalar_lea.vmem %s0, 2
    %s14 = smov 3
    %v15 = vld [vmem:[%s13] ss:$4 sm:%s14]
    %16 = vrot.lane.b32.xlu0 %v15, 64
    %v17 = vpop.permute.xlu0 %16
    %vm18 = vcmask 785920
    %19 = vst.msk [vmem:[#allocation0] ss:$8 sm:$0x3] %vm18, %v17
    %s20 = scalar_lea.vmem %s0, 1
    %s21 = smov 3
    %v22 = vld [vmem:[%s20] ss:$4 sm:%s21]
    %23 = vrot.lane.b32.xlu0 %v22, 32
    %v24 = vpop.permute.xlu0 %23
    %vm25 = vcmask 523520
    %26 = vst.msk [vmem:[#allocation0] ss:$8 sm:$0x3] %vm25, %v24
    %s28 = sshll.u32 1, 1
    %s29 = ssub.s32 %s28, 1
    %v31 = vld [vmem:[#allocation0] sm:%s29]
    %s32 = sshll.u32 1, 1
    %s33 = ssub.s32 %s32, 1
    %34 = vst [vmem:[%s1] sm:%s33] %v31
    %s35 = scalar_lea.vmem [#allocation0], 8
    %v36 = vld [vmem:[%s35] sm:%s29]
    %s37 = sshll.u32 1, 1
    %s38 = ssub.s32 %s37, 1
    %s39 = scalar_lea.vmem %s1, 1
    %40 = vst [vmem:[%s39] sm:%s38] %v36

// kernel: mul.4
$region0: #{mul.4}
  %s0 = inlined_call_operand.vmem [shape: f32[3,3,3,16], index: 0, kind: input, shape index: {}]
  %s1 = inlined_call_operand.vmem [shape: f32[27,16], index: 1, kind: output, shape index: {}]
  $region1: #{mul.4} parent=0
    #allocation0 [shape = 'u8[36864]{0}', space=vmem, size = 0x9000, scoped, tag = 'scoped mem for input reshape']
    %s3 = sshll.u32 1, 4
    %s4 = ssub.s32 %s3, 1
    %s5 = smul.addr 4, 8
    %s6 = scalar_lea.vmem %s0, %s5
    %v7 = vld [vmem:[%s6] sm:%s4]
    %s8 = scalar_lea.vmem [#allocation0], 64
    %9 = vst [vmem:[%s8] sm:%s4] %v7
    %s10 = smul.addr 4, 7
    %s11 = scalar_lea.vmem %s0, %s10
    %v12 = vld [vmem:[%s11] sm:%s4]
    %s13 = scalar_lea.vmem [#allocation0], 56
    %14 = vst [vmem:[%s13] sm:%s4] %v12
    %s15 = smul.addr 4, 6
    %s16 = scalar_lea.vmem %s0, %s15
    %v17 = vld [vmem:[%s16] sm:%s4]
    %s18 = scalar_lea.vmem [#allocation0], 48
    %19 = vst [vmem:[%s18] sm:%s4] %v17
    %s20 = smul.addr 4, 5
    %s21 = scalar_lea.vmem %s0, %s20
    %v22 = vld [vmem:[%s21] sm:%s4]
    %s23 = scalar_lea.vmem [#allocation0], 40
    %24 = vst [vmem:[%s23] sm:%s4] %v22
    %s25 = smul.addr 4, 4
    %s26 = scalar_lea.vmem %s0, %s25
    %v27 = vld [vmem:[%s26] sm:%s4]
    %s28 = scalar_lea.vmem [#allocation0], 32
    %29 = vst [vmem:[%s28] sm:%s4] %v27
    %s30 = smul.addr 4, 3
    %s31 = scalar_lea.vmem %s0, %s30
    %v32 = vld [vmem:[%s31] sm:%s4]
    %s33 = scalar_lea.vmem [#allocation0], 24
    %34 = vst [vmem:[%s33] sm:%s4] %v32
    %s35 = smul.addr 4, 2
    %s36 = scalar_lea.vmem %s0, %s35
    %v37 = vld [vmem:[%s36] sm:%s4]
    %s38 = scalar_lea.vmem [#allocation0], 16
    %39 = vst [vmem:[%s38] sm:%s4] %v37
    %s40 = scalar_lea.vmem %s0, 4
    %v41 = vld [vmem:[%s40] sm:%s4]
    %s42 = scalar_lea.vmem [#allocation0], 8
    %43 = vst [vmem:[%s42] sm:%s4] %v41
    %v44 = vld [vmem:[%s0] sm:%s4]
    %45 = vst [vmem:[#allocation0] sm:%s4] %v44
    %v46 = vld [vmem:[#allocation0] sm:$0x7]
    %vm47 = vcmask 130048
    %48 = vst.msk [vmem:[%s1] sm:$0x7] %vm47, %v46
    %s49 = scalar_lea.vmem [#allocation0], 8
    %v50 = vld [vmem:[%s49] sm:$0x7]
    %vm51 = vcmask 130048
    %s52 = scalar_lea.vmem %s1, 3
    %53 = vst.msk [vmem:[%s52] sm:$0x7] %vm51, %v50
    %s54 = scalar_lea.vmem [#allocation0], 16
    %v55 = vld [vmem:[%s54] sm:$0x7]
    %vm56 = vcmask 130048
    %s57 = scalar_lea.vmem %s1, 6
    %58 = vst.msk [vmem:[%s57] sm:$0x7] %vm56, %v55
    %s59 = scalar_lea.vmem [#allocation0], 24
    %v60 = vld [vmem:[%s59] sm:$0x7]
    %vm61 = vcmask 130048
    %s62 = scalar_lea.vmem %s1, 9
    %63 = vst.msk [vmem:[%s62] sm:$0x7] %vm61, %v60
    %s64 = scalar_lea.vmem [#allocation0], 32
    %v65 = vld [vmem:[%s64] sm:$0x7]
    %vm66 = vcmask 130048
    %s67 = scalar_lea.vmem %s1, 12
    %68 = vst.msk [vmem:[%s67] sm:$0x7] %vm66, %v65
    %s69 = scalar_lea.vmem [#allocation0], 40
    %v70 = vld [vmem:[%s69] sm:$0x7]
    %vm71 = vcmask 130048
    %s72 = scalar_lea.vmem %s1, 15
    %73 = vst.msk [vmem:[%s72] sm:$0x7] %vm71, %v70
    %s74 = scalar_lea.vmem [#allocation0], 48
    %v75 = vld [vmem:[%s74] sm:$0x7]
    %vm76 = vcmask 130048
    %s77 = scalar_lea.vmem %s1, 18
    %78 = vst.msk [vmem:[%s77] sm:$0x7] %vm76, %v75
    %s79 = scalar_lea.vmem [#allocation0], 56
    %v80 = vld [vmem:[%s79] sm:$0x7]
    %vm81 = vcmask 130048
    %s82 = scalar_lea.vmem %s1, 21
    %83 = vst.msk [vmem:[%s82] sm:$0x7] %vm81, %v80
    %s84 = scalar_lea.vmem [#allocation0], 64
    %v85 = vld [vmem:[%s84] sm:$0x7]
    %vm86 = vcmask 130048
    %s87 = scalar_lea.vmem %s1, 24
    %88 = vst.msk [vmem:[%s87] sm:$0x7] %vm86, %v85

// kernel: visual_stream.1
$region0: #{visual_stream.1}
  #allocation0 [shape = 'u32[]', space=smem, size = 0x4, offset = 0x4, fixed_abs, tag = 'smem constant byte address 0x4 - core index']
  #allocation1 [shape = 'u32[144,128]{1,0:T(1,128)}', space=vmem, size = 0x12000, scoped, tag = 'internal scratch']
  %s0 = inlined_call_operand.vmem [shape: bf16[2,32,216], index: 0, kind: input, shape index: {}]
  %s1 = inlined_call_operand.vmem [shape: bf16[216,128], index: 1, kind: input, shape index: {}]
  %s2 = inlined_call_operand.vmem [shape: f32[1,128], index: 2, kind: input, shape index: {}]
  %s3 = inlined_call_operand.vmem [shape: bf16[1152,256], index: 3, kind: input, shape index: {}]
  %s4 = inlined_call_operand.vmem [shape: f32[1,256], index: 4, kind: input, shape index: {}]
  %s5 = inlined_call_operand.vmem [shape: bf16[256,256], index: 5, kind: input, shape index: {}]
  %s6 = inlined_call_operand.vmem [shape: f32[1,256], index: 6, kind: input, shape index: {}]
  %s7 = inlined_call_operand.vmem [shape: f32[2,1,256], index: 7, kind: output, shape index: {}]
  %s8 = sld [smem:[#allocation0]]
  $region61: #{visual_stream.1} parent=0
    _
  %s10 = ssub.s32 1, %s8
  %s11 = scalar_select 0, %s10, %s8
  loop: start=0, step=1, limit=4
  $region2: #{visual_stream.1} parent=0 // loop_pre_header
    _
  $region3: #{visual_stream.1} parent=0 // loop_header
    %s13 = sphi 0, %s17
    %p14 = scmp.ge.s32.totalorder %s13, 4
    %s23 = sphi 0, %s25
    %s26 = sphi 0, %s23
    %s27 = sphi 0, %s26
    %s43 = sphi 0, %s27
    %s47 = sphi 0, %s47
    %s49 = sphi 0, %s47
    %s50 = sphi 0, %s49
    %s64 = sphi 0, %s50
    %s68 = sphi 0, %s68
    %s70 = sphi 0, %s68
    %s71 = sphi 0, %s70
    %s85 = sphi 0, %s71
    %s89 = sphi 0, %s89
    %s91 = sphi 0, %s89
    %s92 = sphi 0, %s91
    %s106 = sphi 0, %s92
    %s110 = sphi 0, %s110
    %s112 = sphi 0, %s110
    %s113 = sphi 0, %s112
    %s127 = sphi 0, %s113
    %s131 = sphi 0, %s131
    %s133 = sphi 0, %s131
    %s134 = sphi 0, %s133
    %s148 = sphi 0, %s134
    %s152 = sphi 0, %s152
    %s154 = sphi 0, %s152
    %s155 = sphi 0, %s154
    %s169 = sphi 0, %s155
    %s175 = sphi 0, %s177
    %s178 = sphi 0, %s175
    %s179 = sphi 0, %s178
    %s195 = sphi 0, %s179
  $region4: #{visual_stream.1} parent=0 // loop_header_branch
    %16 = sbr.rel (%p14) target = $region8
  $region5: #{visual_stream.1} parent=0 // loop_body
    %s18 = ssub.s32 %s13, 1
    %s19 = ssub.s32 %s13, 2
    %s20 = sadd.s32 %s13, 1
    %s21 = ssub.s32 %s13, %s20
    %p22 = scmp.eq.s32.totalorder %s21, 0
    %s24 = sadd.s32 %s23, 1
    %s25 = scalar_select %p22, %s23, %s24
    %p28 = pneg %p22
    %p29 = scmp.eq.s32.totalorder %s13, 1
    %p30 = por %p28, %p29
    %p31 = scmp.ne.s32.totalorder %s23, %s26
    %p32 = scmp.eq.s32.totalorder %s13, 0
    %p33 = por %p31, %p32
    %p34 = scmp.ne.s32.totalorder %s23, %s26
    %p35 = scmp.eq.s32.totalorder %s18, 1
    %p36 = por %p34, %p35
    %p37 = scmp.ne.s32.totalorder %s26, %s27
    %p38 = scmp.eq.s32.totalorder %s18, 0
    %p39 = por %p37, %p38
    %p40 = scmp.ne.s32.totalorder %s26, %s27
    %p41 = scmp.eq.s32.totalorder %s19, 1
    %p42 = por %p40, %p41
    %p44 = scmp.ne.s32.totalorder %s27, %s43
    %p45 = scmp.eq.s32.totalorder %s19, 0
    %p46 = por %p44, %p45
    %s48 = sadd.s32 %s47, 1
    %p51 = scmp.eq.s32.totalorder %s13, 1
    %p52 = scmp.ne.s32.totalorder %s47, %s49
    %p53 = scmp.eq.s32.totalorder %s13, 0
    %p54 = por %p52, %p53
    %p55 = scmp.ne.s32.totalorder %s47, %s49
    %p56 = scmp.eq.s32.totalorder %s18, 1
    %p57 = por %p55, %p56
    %p58 = scmp.ne.s32.totalorder %s49, %s50
    %p59 = scmp.eq.s32.totalorder %s18, 0
    %p60 = por %p58, %p59
    %p61 = scmp.ne.s32.totalorder %s49, %s50
    %p62 = scmp.eq.s32.totalorder %s19, 1
    %p63 = por %p61, %p62
    %p65 = scmp.ne.s32.totalorder %s50, %s64
    %p66 = scmp.eq.s32.totalorder %s19, 0
    %p67 = por %p65, %p66
    %s69 = sadd.s32 %s68, 1
    %p72 = scmp.eq.s32.totalorder %s13, 1
    %p73 = scmp.ne.s32.totalorder %s68, %s70
    %p74 = scmp.eq.s32.totalorder %s13, 0
    %p75 = por %p73, %p74
    %p76 = scmp.ne.s32.totalorder %s68, %s70
    %p77 = scmp.eq.s32.totalorder %s18, 1
    %p78 = por %p76, %p77
    %p79 = scmp.ne.s32.totalorder %s70, %s71
    %p80 = scmp.eq.s32.totalorder %s18, 0
    %p81 = por %p79, %p80
    %p82 = scmp.ne.s32.totalorder %s70, %s71
    %p83 = scmp.eq.s32.totalorder %s19, 1
    %p84 = por %p82, %p83
    %p86 = scmp.ne.s32.totalorder %s71, %s85
    %p87 = scmp.eq.s32.totalorder %s19, 0
    %p88 = por %p86, %p87
    %s90 = sadd.s32 %s89, 1
    %p93 = scmp.eq.s32.totalorder %s13, 1
    %p94 = scmp.ne.s32.totalorder %s89, %s91
    %p95 = scmp.eq.s32.totalorder %s13, 0
    %p96 = por %p94, %p95
    %p97 = scmp.ne.s32.totalorder %s89, %s91
    %p98 = scmp.eq.s32.totalorder %s18, 1
    %p99 = por %p97, %p98
    %p100 = scmp.ne.s32.totalorder %s91, %s92
    %p101 = scmp.eq.s32.totalorder %s18, 0
    %p102 = por %p100, %p101
    %p103 = scmp.ne.s32.totalorder %s91, %s92
    %p104 = scmp.eq.s32.totalorder %s19, 1
    %p105 = por %p103, %p104
    %p107 = scmp.ne.s32.totalorder %s92, %s106
    %p108 = scmp.eq.s32.totalorder %s19, 0
    %p109 = por %p107, %p108
    %s111 = sadd.s32 %s110, 1
    %p114 = scmp.eq.s32.totalorder %s13, 1
    %p115 = scmp.ne.s32.totalorder %s110, %s112
    %p116 = scmp.eq.s32.totalorder %s13, 0
    %p117 = por %p115, %p116
    %p118 = scmp.ne.s32.totalorder %s110, %s112
    %p119 = scmp.eq.s32.totalorder %s18, 1
    %p120 = por %p118, %p119
    %p121 = scmp.ne.s32.totalorder %s112, %s113
    %p122 = scmp.eq.s32.totalorder %s18, 0
    %p123 = por %p121, %p122
    %p124 = scmp.ne.s32.totalorder %s112, %s113
    %p125 = scmp.eq.s32.totalorder %s19, 1
    %p126 = por %p124, %p125
    %p128 = scmp.ne.s32.totalorder %s113, %s127
    %p129 = scmp.eq.s32.totalorder %s19, 0
    %p130 = por %p128, %p129
    %s132 = sadd.s32 %s131, 1
    %p135 = scmp.eq.s32.totalorder %s13, 1
    %p136 = scmp.ne.s32.totalorder %s131, %s133
    %p137 = scmp.eq.s32.totalorder %s13, 0
    %p138 = por %p136, %p137
    %p139 = scmp.ne.s32.totalorder %s131, %s133
    %p140 = scmp.eq.s32.totalorder %s18, 1
    %p141 = por %p139, %p140
    %p142 = scmp.ne.s32.totalorder %s133, %s134
    %p143 = scmp.eq.s32.totalorder %s18, 0
    %p144 = por %p142, %p143
    %p145 = scmp.ne.s32.totalorder %s133, %s134
    %p146 = scmp.eq.s32.totalorder %s19, 1
    %p147 = por %p145, %p146
    %p149 = scmp.ne.s32.totalorder %s134, %s148
    %p150 = scmp.eq.s32.totalorder %s19, 0
    %p151 = por %p149, %p150
    %s153 = sadd.s32 %s152, 1
    %p156 = scmp.eq.s32.totalorder %s13, 1
    %p157 = scmp.ne.s32.totalorder %s152, %s154
    %p158 = scmp.eq.s32.totalorder %s13, 0
    %p159 = por %p157, %p158
    %p160 = scmp.ne.s32.totalorder %s152, %s154
    %p161 = scmp.eq.s32.totalorder %s18, 1
    %p162 = por %p160, %p161
    %p163 = scmp.ne.s32.totalorder %s154, %s155
    %p164 = scmp.eq.s32.totalorder %s18, 0
    %p165 = por %p163, %p164
    %p166 = scmp.ne.s32.totalorder %s154, %s155
    %p167 = scmp.eq.s32.totalorder %s19, 1
    %p168 = por %p166, %p167
    %p170 = scmp.ne.s32.totalorder %s155, %s169
    %p171 = scmp.eq.s32.totalorder %s19, 0
    %p172 = por %p170, %p171
    %s173 = ssub.s32 %s13, %s20
    %p174 = scmp.eq.s32.totalorder %s173, 0
    %s176 = sadd.s32 %s175, 1
    %s177 = scalar_select %p174, %s175, %s176
    %p180 = pneg %p174
    %p181 = scmp.eq.s32.totalorder %s13, 1
    %p182 = por %p180, %p181
    %p183 = scmp.ne.s32.totalorder %s175, %s178
    %p184 = scmp.eq.s32.totalorder %s13, 0
    %p185 = por %p183, %p184
    %p186 = scmp.ne.s32.totalorder %s175, %s178
    %p187 = scmp.eq.s32.totalorder %s18, 1
    %p188 = por %p186, %p187
    %p189 = scmp.ne.s32.totalorder %s178, %s179
    %p190 = scmp.eq.s32.totalorder %s18, 0
    %p191 = por %p189, %p190
    %p192 = scmp.ne.s32.totalorder %s178, %s179
    %p193 = scmp.eq.s32.totalorder %s19, 1
    %p194 = por %p192, %p193
    %p196 = scmp.ne.s32.totalorder %s179, %s195
    %p197 = scmp.eq.s32.totalorder %s19, 0
    %p198 = por %p196, %p197
    %p199 = scmp.le.s32.totalorder 1, %s13
    %p200 = scmp.lt.s32.totalorder %s13, 3
    %p201 = pnand %p199, %p200
    %p202 = pneg %p201
    // Predicated region
    $region9: #{visual_stream.1} parent=5 // pred_check
      _
    $region10: #{visual_stream.1} parent=5 // pred_check_branch
      %204 = sbr.rel (%p201) target = $region12
    $region11: #{visual_stream.1} parent=5 // pred_region
      %s205 = ssub.s32 %s13, 1
      // Predicated region
      $region13: #{visual_stream.1} parent=11 // pred_check
        %p206 = pneg %p60
      $region14: #{visual_stream.1} parent=11 // pred_check_branch
        %208 = sbr.rel (%p206) target = $region16
      $region15: #{visual_stream.1} parent=11 // pred_region
        _
      $region16: #{visual_stream.1} parent=11 // pred_fallthru
        _
      // Predicated region
      $region17: #{visual_stream.1} parent=11 // pred_check
        %p209 = pneg %p81
      $region18: #{visual_stream.1} parent=11 // pred_check_branch
        %211 = sbr.rel (%p209) target = $region20
      $region19: #{visual_stream.1} parent=11 // pred_region
        _
      $region20: #{visual_stream.1} parent=11 // pred_fallthru
        _
      // Predicated region
      $region21: #{visual_stream.1} parent=11 // pred_check
        %p212 = pneg %p102
      $region22: #{visual_stream.1} parent=11 // pred_check_branch
        %214 = sbr.rel (%p212) target = $region24
      $region23: #{visual_stream.1} parent=11 // pred_region
        _
      $region24: #{visual_stream.1} parent=11 // pred_fallthru
        _
      // Predicated region
      $region25: #{visual_stream.1} parent=11 // pred_check
        %p215 = pneg %p123
      $region26: #{visual_stream.1} parent=11 // pred_check_branch
        %217 = sbr.rel (%p215) target = $region28
      $region27: #{visual_stream.1} parent=11 // pred_region
        _
      $region28: #{visual_stream.1} parent=11 // pred_fallthru
        _
      // Predicated region
      $region29: #{visual_stream.1} parent=11 // pred_check
        %p218 = pneg %p144
      $region30: #{visual_stream.1} parent=11 // pred_check_branch
        %220 = sbr.rel (%p218) target = $region32
      $region31: #{visual_stream.1} parent=11 // pred_region
        _
      $region32: #{visual_stream.1} parent=11 // pred_fallthru
        _
      // Predicated region
      $region33: #{visual_stream.1} parent=11 // pred_check
        %p221 = pneg %p165
      $region34: #{visual_stream.1} parent=11 // pred_check_branch
        %223 = sbr.rel (%p221) target = $region36
      $region35: #{visual_stream.1} parent=11 // pred_region
        _
      $region36: #{visual_stream.1} parent=11 // pred_fallthru
        _
    $region12: #{visual_stream.1} parent=5 // pred_fallthru
      _
    %p224 = scmp.lt.s32.totalorder %s13, 2
    // Predicated region
    $region37: #{visual_stream.1} parent=5 // pred_check
      %p225 = pneg %p224
    $region38: #{visual_stream.1} parent=5 // pred_check_branch
      %227 = sbr.rel (%p225) target = $region40
    $region39: #{visual_stream.1} parent=5 // pred_region
      // Predicated region
      $region41: #{visual_stream.1} parent=39 // pred_check
        %p228 = pneg %p33
      $region42: #{visual_stream.1} parent=39 // pred_check_branch
        %230 = sbr.rel (%p228) target = $region44
      $region43: #{visual_stream.1} parent=39 // pred_region
        %p231 = scmp.lt.s32.totalorder %s13, 1
        %s232 = scalar_select %p231, %s13, 1
        %s233 = smul.addr %s232, 8
        %s234 = smul.addr %s233, 4
        %s235 = scalar_lea.vmem %s0, %s234
      $region44: #{visual_stream.1} parent=39 // pred_fallthru
        _
    $region40: #{visual_stream.1} parent=5 // pred_fallthru
      _
    %p236 = scmp.le.s32.totalorder 1, %s13
    %p237 = scmp.lt.s32.totalorder %s13, 3
    %p238 = pnand %p236, %p237
    %p239 = pneg %p238
    // Predicated region
    $region45: #{visual_stream.1} parent=5 // pred_check
      _
    $region46: #{visual_stream.1} parent=5 // pred_check_branch
      %241 = sbr.rel (%p238) target = $region48
    $region47: #{visual_stream.1} parent=5 // pred_region
      %s242 = ssub.s32 %s13, 1
      %p243 = scmp.lt.s32.totalorder %s18, 1
      %s244 = scalar_select %p243, %s18, 1
      %s245 = smul.addr %s244, 8
      %s246 = smul.addr %s245, 4
      %s247 = scalar_lea.vmem %s0, %s246
      %p248 = pneg %p39
      %p249 = pneg %p36
      %p250 = pneg %p60
      %p251 = pneg %p57
      %p252 = pneg %p81
      %p253 = pneg %p78
      %p254 = pneg %p102
      %p255 = pneg %p99
      %p256 = pneg %p123
      %p257 = pneg %p120
      %p258 = pneg %p144
      %p259 = pneg %p141
      %p260 = pneg %p165
      %p261 = pneg %p162
      %p262 = pneg %p191
      %p263 = pneg %p188
      %p264 = scmp.lt.s32.totalorder %s18, 1
      %s265 = scalar_select %p264, %s18, 1
      %s266 = smul.addr %s265, 2
      %s267 = scalar_lea.vmem %s7, %s266
      %p268 = scmp.lt.s32.totalorder %s18, 1
      %s269 = scalar_select %p268, %s18, 1
      %s270 = smul.addr %s269, 8
      %s271 = smul.addr %s270, 4
      %s272 = scalar_lea.vmem %s0, %s271
      %p273 = scmp.lt.s32.totalorder %s18, 1
      %s274 = scalar_select %p273, %s18, 1
      %s275 = smul.addr %s274, 2
      %s276 = scalar_lea.vmem %s7, %s275
      %v278 = vld [vmem:[%s272] sm:$0xff]
      %v279 = vld [vmem:[%s272 + $0x8] sm:$0xff]
      %v280 = vld [vmem:[%s272 + $0x10] sm:$0xff]
      %v281 = vld [vmem:[%s272 + $0x18] sm:$0xff]
      %v282 = vld [vmem:[%s1] sm:$0xf]
      %v283 = vld [vmem:[%s1 + $0x4] sm:$0xf]
      %v284 = vld [vmem:[%s1 + $0x8] sm:$0xf]
      %v285 = vld [vmem:[%s1 + $0xc] sm:$0xf]
      %v286 = vld [vmem:[%s1 + $0x10] sm:$0xf]
      %v287 = vld [vmem:[%s1 + $0x14] sm:$0xf]
      %v288 = vld [vmem:[%s1 + $0x18] sm:$0xf]
      %v289 = vld [vmem:[%s1 + $0x1c] sm:$0xf]
      %v290 = vld [vmem:[%s1 + $0x20] sm:$0xf]
      %v291 = vld [vmem:[%s1 + $0x24] sm:$0xf]
      %v292 = vld [vmem:[%s1 + $0x28] sm:$0xf]
      %v293 = vld [vmem:[%s1 + $0x2c] sm:$0xf]
      %v294 = vld [vmem:[%s1 + $0x30] sm:$0xf]
      %v295 = vld [vmem:[%s1 + $0x34] sm:$0xf]
      %v296 = vld [vmem:[%s1 + $0x38] sm:$0xf]
      %v297 = vld [vmem:[%s1 + $0x3c] sm:$0xf]
      %v298 = vld [vmem:[%s1 + $0x40] sm:$0xf]
      %v299 = vld [vmem:[%s1 + $0x44] sm:$0xf]
      %v300 = vld [vmem:[%s1 + $0x48] sm:$0xf]
      %v301 = vld [vmem:[%s1 + $0x4c] sm:$0xf]
      %v302 = vld [vmem:[%s1 + $0x50] sm:$0xf]
      %v303 = vld [vmem:[%s1 + $0x54] sm:$0xf]
      %v304 = vld [vmem:[%s1 + $0x58] sm:$0xf]
      %v305 = vld [vmem:[%s1 + $0x5c] sm:$0xf]
      %v306 = vld [vmem:[%s1 + $0x60] sm:$0xf]
      %v307 = vld [vmem:[%s1 + $0x64] sm:$0xf]
      %v308 = vld [vmem:[%s1 + $0x68] sm:$0xf]
      %v309 = vld [vmem:[%s2] sm:$0x1]
      %v311 = vlaneseq
      %v312 = vshrl.u32 %v311, 7
      %v313 = vsub.s32 0, %v312
      %v314 = vrot.slane %v309, %v313
      %v320 = vunpack.c.l.b16 %v278
      %v321 = vunpack.c.h.b16 %v278
      %v322 = vunpack.c.l.b16 %v279
      %v323 = vunpack.c.h.b16 %v279
      %v324 = vunpack.c.l.b16 %v280
      %v325 = vunpack.c.h.b16 %v280
      %v326 = vunpack.c.l.b16 %v281
      %v327 = vunpack.c.h.b16 %v281
      %v328 = vpack.c.b16 %v322, %v320
      %v329 = vpack.c.b16 %v323, %v321
      %v330 = vpack.c.b16 %v326, %v324
      %v331 = vpack.c.b16 %v327, %v325
      %v361 = vunpack.c.l.b16 %v282
      %v362 = vunpack.c.l.b16 %v283
      %v363 = vunpack.c.l.b16 %v284
      %v364 = vunpack.c.l.b16 %v285
      %v365 = vunpack.c.l.b16 %v286
      %v366 = vunpack.c.l.b16 %v287
      %v367 = vunpack.c.l.b16 %v288
      %v368 = vunpack.c.l.b16 %v289
      %v369 = vunpack.c.l.b16 %v290
      %v370 = vunpack.c.l.b16 %v291
      %v371 = vunpack.c.l.b16 %v292
      %v372 = vunpack.c.l.b16 %v293
      %v373 = vunpack.c.l.b16 %v294
      %v374 = vunpack.c.l.b16 %v295
      %v375 = vunpack.c.l.b16 %v296
      %v376 = vunpack.c.l.b16 %v297
      %v377 = vunpack.c.l.b16 %v298
      %v378 = vunpack.c.l.b16 %v299
      %v379 = vunpack.c.l.b16 %v300
      %v380 = vunpack.c.l.b16 %v301
      %v381 = vunpack.c.l.b16 %v302
      %v382 = vunpack.c.l.b16 %v303
      %v383 = vunpack.c.l.b16 %v304
      %v384 = vunpack.c.l.b16 %v305
      %v385 = vunpack.c.l.b16 %v306
      %v386 = vunpack.c.l.b16 %v307
      %v387 = vunpack.c.l.b16 %v308
      %v388 = vpack.c.b16 %v362, %v361
      %v389 = vpack.c.b16 %v364, %v363
      %v390 = vpack.c.b16 %v366, %v365
      %v391 = vpack.c.b16 %v368, %v367
      %v392 = vpack.c.b16 %v370, %v369
      %v393 = vpack.c.b16 %v372, %v371
      %v394 = vpack.c.b16 %v374, %v373
      %v395 = vpack.c.b16 %v376, %v375
      %v396 = vpack.c.b16 %v378, %v377
      %v397 = vpack.c.b16 %v380, %v379
      %v398 = vpack.c.b16 %v382, %v381
      %v399 = vpack.c.b16 %v384, %v383
      %v400 = vpack.c.b16 %v386, %v385
      %v401 = vpack.c.b16 %v387, %v387
      %vm415 = vcmask 719872
      %v417 = vsel %vm415, %v329, 0
      %v420 = vsel %vm415, %v331, 0
      %vm422 = vcmask 1043456
      %v424 = vsel %vm422, %v401, 0
      %426 = vmatprep.subr.bf16.mxu0 0
      %427 = vmatpush1.bf16.msra.mxu0 %v395
      %428 = vmatprep.subr.bf16.mxu0 0
      %429 = vmatpush1.bf16.msra.mxu0 %v394
      %430 = vmatprep.subr.bf16.mxu0 0
      %431 = vmatpush1.bf16.msra.mxu0 %v393
      %432 = vmatprep.subr.bf16.mxu0 0
      %433 = vmatpush1.bf16.msra.mxu0 %v392
      %434 = vmatprep.subr.bf16.mxu0 0
      %435 = vmatpush1.bf16.msra.mxu0 %v391
      %436 = vmatprep.subr.bf16.mxu0 0
      %437 = vmatpush1.bf16.msra.mxu0 %v390
      %438 = vmatprep.subr.bf16.mxu0 0
      %439 = vmatpush1.bf16.msra.mxu0 %v389
      %440 = vmatprep.subr.bf16.mxu0 0
      %441 = vmatpush1.bf16.msra.mxu0 %v388
      %442 = vmatprep.subr.bf16.mxu0 0
      %443 = vmatpush2.bf16.msra.mxu0 0
      %444 = vmatprep.subr.bf16.mxu0 0
      %445 = vmatpush2.bf16.msra.mxu0 0
      %446 = vmatprep.subr.bf16.mxu0 0
      %447 = vmatpush2.bf16.msra.mxu0 %v424
      %448 = vmatprep.subr.bf16.mxu0 0
      %449 = vmatpush2.bf16.msra.mxu0 %v400
      %450 = vmatprep.subr.bf16.mxu0 0
      %451 = vmatpush2.bf16.msra.mxu0 %v399
      %452 = vmatprep.subr.bf16.mxu0 0
      %453 = vmatpush2.bf16.msra.mxu0 %v398
      %454 = vmatprep.subr.bf16.mxu0 0
      %455 = vmatpush2.bf16.msra.mxu0 %v397
      %456 = vmatprep.subr.bf16.mxu0 0
      %457 = vmatpush2.bf16.msra.mxu0 %v396
      %458 = vmatprep.mubr.bf16.mxu0 %v417
      %459 = vmatmul.mubr.bf16.gmra.mxu0 %v328
      %v460 = vpop.f32.mrf.mxu0
      %v461 = vadd.f32 %v314, %v460
      %v462 = vpop.f32.mrf.mxu0
      %v463 = vpop.f32.mrf.mxu0
      %v464 = vadd.f32 %v314, %v463
      %v465 = vpop.f32.mrf.mxu0
      %466 = vmatprep.mubr.bf16.mxu0 %v420
      %467 = vmatmul.mubr.bf16.gmra.mxu0 %v330
      %v468 = vpop.f32.mrf.mxu0
      %v469 = vadd.f32 %v314, %v468
      %v470 = vpop.f32.mrf.mxu0
      %v471 = vpop.f32.mrf.mxu0
      %v472 = vadd.f32 %v314, %v471
      %v473 = vpop.f32.mrf.mxu0
      %474 = vdwg.mxu0
      %v475 = vmul.f32 %v461, 0.5
      %v476 = vmul.f32 %v464, 0.5
      %v477 = vmul.f32 %v469, 0.5
      %v478 = vmul.f32 %v472, 0.5
      %v479 = vmul.f32 %v461, 0.044715
      %v480 = vmul.f32 %v464, 0.044715
      %v481 = vmul.f32 %v469, 0.044715
      %v482 = vmul.f32 %v472, 0.044715
      %v483 = vmul.f32 %v479, %v461
      %v484 = vmul.f32 %v480, %v464
      %v485 = vmul.f32 %v481, %v469
      %v486 = vmul.f32 %v482, %v472
      %v487 = vmul.f32 %v483, %v461
      %v488 = vmul.f32 %v484, %v464
      %v489 = vmul.f32 %v485, %v469
      %v490 = vmul.f32 %v486, %v472
      %v491 = vadd.f32 %v461, %v487
      %v492 = vadd.f32 %v464, %v488
      %v493 = vadd.f32 %v469, %v489
      %v494 = vadd.f32 %v472, %v490
      %v495 = vmul.f32 %v491, 0.7978846
      %v496 = vmul.f32 %v492, 0.7978846
      %v497 = vmul.f32 %v493, 0.7978846
      %v498 = vmul.f32 %v494, 0.7978846
      %v499 = vtanh.pop %v495
      %v500 = vtanh.pop %v496
      %v501 = vtanh.pop %v497
      %v502 = vtanh.pop %v498
      %v503 = vadd.f32 %v499, 1.0
      %v504 = vadd.f32 %v500, 1.0
      %v505 = vadd.f32 %v501, 1.0
      %v506 = vadd.f32 %v502, 1.0
      %v507 = vmul.f32 %v475, %v503
      %v508 = vmul.f32 %v476, %v504
      %v509 = vmul.f32 %v477, %v505
      %v510 = vmul.f32 %v478, %v506
      %v511 = vmax.f32 %v507, %v508
      %v512 = vmax.f32 %v509, %v510
      %v513 = vmax.f32 %v511, %v512
      %515 = vrot.lane.b32.xlu0 %v513, 16
      %v516 = vpop.permute.xlu0 %515
      %vm518 = vcmask 130048
      %v519 = vsel %vm518, 0.0, %v516
      %v520 = vsel %vm518, %v516, 0.0
      %v523 = vrot.slane %v519, 7
      %v524 = vrot.slane %v520, 7
      %vm527 = vcmask 1040384
      %v528 = vsel %vm527, 0.0, %v523
      %v529 = vsel %vm527, 0.0, %v524
      %v530 = vsel %vm527, %v523, 0.0
      %v531 = vsel %vm527, %v524, 0.0
      %534 = vrot.lane.b32.xlu0 %v528, 112
      %v535 = vpop.permute.xlu0 %534
      %536 = vrot.lane.b32.xlu0 %v529, 112
      %v537 = vpop.permute.xlu0 %536
      %vm538 = vcmask 916480
      %v539 = vsel %vm538, %v535, %v537
      %541 = vrot.lane.b32.xlu0 %v528, 96
      %v542 = vpop.permute.xlu0 %541
      %543 = vrot.lane.b32.xlu0 %v529, 96
      %v544 = vpop.permute.xlu0 %543
      %vm545 = vcmask 785408
      %v546 = vsel %vm545, %v542, %v544
      %vm549 = vcmask 1046528
      %v550 = vrot.slane %v528, 1
      %v551 = vrot.slane %v530, 1
      %v552 = vsel %vm549, %v550, %v551
      %v555 = vrot.slane %v529, 1
      %v556 = vrot.slane %v531, 1
      %v557 = vsel %vm549, %v555, %v556
      %558 = vrot.lane.b32.xlu0 %v552, 112
      %v559 = vpop.permute.xlu0 %558
      %560 = vrot.lane.b32.xlu0 %v557, 112
      %v561 = vpop.permute.xlu0 %560
      %v562 = vsel %vm538, %v559, %v561
      %564 = vrot.lane.b32.xlu0 %v552, 96
      %v565 = vpop.permute.xlu0 %564
      %566 = vrot.lane.b32.xlu0 %v557, 96
      %v567 = vpop.permute.xlu0 %566
      %v568 = vsel %vm545, %v565, %v567
      %vm570 = vcmask 1045504
      %v571 = vrot.slane %v528, 2
      %v572 = vrot.slane %v530, 2
      %v573 = vsel %vm570, %v571, %v572
      %v575 = vrot.slane %v529, 2
      %v576 = vrot.slane %v531, 2
      %v577 = vsel %vm570, %v575, %v576
      %578 = vrot.lane.b32.xlu0 %v573, 112
      %v579 = vpop.permute.xlu0 %578
      %580 = vrot.lane.b32.xlu0 %v577, 112
      %v581 = vpop.permute.xlu0 %580
      %v582 = vsel %vm538, %v579, %v581
      %584 = vrot.lane.b32.xlu0 %v573, 96
      %v585 = vpop.permute.xlu0 %584
      %586 = vrot.lane.b32.xlu0 %v577, 96
      %v587 = vpop.permute.xlu0 %586
      %v588 = vsel %vm545, %v585, %v587
      %v590 = vpack.c.bf16 %v528, %v528
      %v591 = vpack.c.bf16 %v539, %v539
      %v592 = vpack.c.bf16 %v546, %v546
      %v593 = vpack.c.bf16 %v552, %v552
      %v594 = vpack.c.bf16 %v562, %v562
      %v595 = vpack.c.bf16 %v568, %v568
      %v596 = vpack.c.bf16 %v573, %v573
      %v597 = vpack.c.bf16 %v582, %v582
      %v598 = vpack.c.bf16 %v588, %v588
      %v599 = vld [vmem:[%s3] sm:$0xff]
      %v600 = vld [vmem:[%s3 + $0x8] sm:$0xff]
      %v601 = vld [vmem:[%s3 + $0x10] sm:$0xff]
      %v602 = vld [vmem:[%s3 + $0x18] sm:$0xff]
      %v603 = vld [vmem:[%s3 + $0x20] sm:$0xff]
      %v604 = vld [vmem:[%s3 + $0x28] sm:$0xff]
      %v605 = vld [vmem:[%s3 + $0x30] sm:$0xff]
      %v606 = vld [vmem:[%s3 + $0x38] sm:$0xff]
      %v607 = vld [vmem:[%s3 + $0x40] sm:$0xff]
      %v608 = vld [vmem:[%s3 + $0x48] sm:$0xff]
      %v609 = vld [vmem:[%s3 + $0x50] sm:$0xff]
      %v610 = vld [vmem:[%s3 + $0x58] sm:$0xff]
      %v611 = vld [vmem:[%s3 + $0x60] sm:$0xff]
      %v612 = vld [vmem:[%s3 + $0x68] sm:$0xff]
      %v613 = vld [vmem:[%s3 + $0x70] sm:$0xff]
      %v614 = vld [vmem:[%s3 + $0x78] sm:$0xff]
      %v615 = vld [vmem:[%s3 + $0x80] sm:$0xff]
      %v616 = vld [vmem:[%s3 + $0x88] sm:$0xff]
      %v617 = vld [vmem:[%s3 + $0x90] sm:$0xff]
      %v618 = vld [vmem:[%s3 + $0x98] sm:$0xff]
      %v619 = vld [vmem:[%s3 + $0xa0] sm:$0xff]
      %v620 = vld [vmem:[%s3 + $0xa8] sm:$0xff]
      %v621 = vld [vmem:[%s3 + $0xb0] sm:$0xff]
      %v622 = vld [vmem:[%s3 + $0xb8] sm:$0xff]
      %v623 = vld [vmem:[%s3 + $0xc0] sm:$0xff]
      %v624 = vld [vmem:[%s3 + $0xc8] sm:$0xff]
      %v625 = vld [vmem:[%s3 + $0xd0] sm:$0xff]
      %v626 = vld [vmem:[%s3 + $0xd8] sm:$0xff]
      %v627 = vld [vmem:[%s3 + $0xe0] sm:$0xff]
      %v628 = vld [vmem:[%s3 + $0xe8] sm:$0xff]
      %v629 = vld [vmem:[%s3 + $0xf0] sm:$0xff]
      %v630 = vld [vmem:[%s3 + $0xf8] sm:$0xff]
      %v631 = vld [vmem:[%s3 + $0x100] sm:$0xff]
      %v632 = vld [vmem:[%s3 + $0x108] sm:$0xff]
      %v633 = vld [vmem:[%s3 + $0x110] sm:$0xff]
      %v634 = vld [vmem:[%s3 + $0x118] sm:$0xff]
      %v635 = vld [vmem:[%s3 + $0x120] sm:$0xff]
      %v636 = vld [vmem:[%s3 + $0x128] sm:$0xff]
      %v637 = vld [vmem:[%s3 + $0x130] sm:$0xff]
      %v638 = vld [vmem:[%s3 + $0x138] sm:$0xff]
      %v639 = vld [vmem:[%s3 + $0x140] sm:$0xff]
      %v640 = vld [vmem:[%s3 + $0x148] sm:$0xff]
      %v641 = vld [vmem:[%s3 + $0x150] sm:$0xff]
      %v642 = vld [vmem:[%s3 + $0x158] sm:$0xff]
      %v643 = vld [vmem:[%s3 + $0x160] sm:$0xff]
      %v644 = vld [vmem:[%s3 + $0x168] sm:$0xff]
      %v645 = vld [vmem:[%s3 + $0x170] sm:$0xff]
      %v646 = vld [vmem:[%s3 + $0x178] sm:$0xff]
      %v647 = vld [vmem:[%s3 + $0x180] sm:$0xff]
      %v648 = vld [vmem:[%s3 + $0x188] sm:$0xff]
      %v649 = vld [vmem:[%s3 + $0x190] sm:$0xff]
      %v650 = vld [vmem:[%s3 + $0x198] sm:$0xff]
      %v651 = vld [vmem:[%s3 + $0x1a0] sm:$0xff]
      %v652 = vld [vmem:[%s3 + $0x1a8] sm:$0xff]
      %v653 = vld [vmem:[%s3 + $0x1b0] sm:$0xff]
      %v654 = vld [vmem:[%s3 + $0x1b8] sm:$0xff]
      %v655 = vld [vmem:[%s3 + $0x1c0] sm:$0xff]
      %v656 = vld [vmem:[%s3 + $0x1c8] sm:$0xff]
      %v657 = vld [vmem:[%s3 + $0x1d0] sm:$0xff]
      %v658 = vld [vmem:[%s3 + $0x1d8] sm:$0xff]
      %v659 = vld [vmem:[%s3 + $0x1e0] sm:$0xff]
      %v660 = vld [vmem:[%s3 + $0x1e8] sm:$0xff]
      %v661 = vld [vmem:[%s3 + $0x1f0] sm:$0xff]
      %v662 = vld [vmem:[%s3 + $0x1f8] sm:$0xff]
      %v663 = vld [vmem:[%s3 + $0x200] sm:$0xff]
      %v664 = vld [vmem:[%s3 + $0x208] sm:$0xff]
      %v665 = vld [vmem:[%s3 + $0x210] sm:$0xff]
      %v666 = vld [vmem:[%s3 + $0x218] sm:$0xff]
      %v667 = vld [vmem:[%s3 + $0x220] sm:$0xff]
      %v668 = vld [vmem:[%s3 + $0x228] sm:$0xff]
      %v669 = vld [vmem:[%s3 + $0x230] sm:$0xff]
      %v670 = vld [vmem:[%s3 + $0x238] sm:$0xff]
      %v671 = vld [vmem:[%s3 + $0x240] sm:$0xff]
      %v672 = vld [vmem:[%s3 + $0x248] sm:$0xff]
      %v673 = vld [vmem:[%s3 + $0x250] sm:$0xff]
      %v674 = vld [vmem:[%s3 + $0x258] sm:$0xff]
      %v675 = vld [vmem:[%s3 + $0x260] sm:$0xff]
      %v676 = vld [vmem:[%s3 + $0x268] sm:$0xff]
      %v677 = vld [vmem:[%s3 + $0x270] sm:$0xff]
      %v678 = vld [vmem:[%s3 + $0x278] sm:$0xff]
      %v679 = vld [vmem:[%s3 + $0x280] sm:$0xff]
      %v680 = vld [vmem:[%s3 + $0x288] sm:$0xff]
      %v681 = vld [vmem:[%s3 + $0x290] sm:$0xff]
      %v682 = vld [vmem:[%s3 + $0x298] sm:$0xff]
      %v683 = vld [vmem:[%s3 + $0x2a0] sm:$0xff]
      %v684 = vld [vmem:[%s3 + $0x2a8] sm:$0xff]
      %v685 = vld [vmem:[%s3 + $0x2b0] sm:$0xff]
      %v686 = vld [vmem:[%s3 + $0x2b8] sm:$0xff]
      %v687 = vld [vmem:[%s3 + $0x2c0] sm:$0xff]
      %v688 = vld [vmem:[%s3 + $0x2c8] sm:$0xff]
      %v689 = vld [vmem:[%s3 + $0x2d0] sm:$0xff]
      %v690 = vld [vmem:[%s3 + $0x2d8] sm:$0xff]
      %v691 = vld [vmem:[%s3 + $0x2e0] sm:$0xff]
      %v692 = vld [vmem:[%s3 + $0x2e8] sm:$0xff]
      %v693 = vld [vmem:[%s3 + $0x2f0] sm:$0xff]
      %v694 = vld [vmem:[%s3 + $0x2f8] sm:$0xff]
      %v695 = vld [vmem:[%s3 + $0x300] sm:$0xff]
      %v696 = vld [vmem:[%s3 + $0x308] sm:$0xff]
      %v697 = vld [vmem:[%s3 + $0x310] sm:$0xff]
      %v698 = vld [vmem:[%s3 + $0x318] sm:$0xff]
      %v699 = vld [vmem:[%s3 + $0x320] sm:$0xff]
      %v700 = vld [vmem:[%s3 + $0x328] sm:$0xff]
      %v701 = vld [vmem:[%s3 + $0x330] sm:$0xff]
      %v702 = vld [vmem:[%s3 + $0x338] sm:$0xff]
      %v703 = vld [vmem:[%s3 + $0x340] sm:$0xff]
      %v704 = vld [vmem:[%s3 + $0x348] sm:$0xff]
      %v705 = vld [vmem:[%s3 + $0x350] sm:$0xff]
      %v706 = vld [vmem:[%s3 + $0x358] sm:$0xff]
      %v707 = vld [vmem:[%s3 + $0x360] sm:$0xff]
      %v708 = vld [vmem:[%s3 + $0x368] sm:$0xff]
      %v709 = vld [vmem:[%s3 + $0x370] sm:$0xff]
      %v710 = vld [vmem:[%s3 + $0x378] sm:$0xff]
      %v711 = vld [vmem:[%s3 + $0x380] sm:$0xff]
      %v712 = vld [vmem:[%s3 + $0x388] sm:$0xff]
      %v713 = vld [vmem:[%s3 + $0x390] sm:$0xff]
      %v714 = vld [vmem:[%s3 + $0x398] sm:$0xff]
      %v715 = vld [vmem:[%s3 + $0x3a0] sm:$0xff]
      %v716 = vld [vmem:[%s3 + $0x3a8] sm:$0xff]
      %v717 = vld [vmem:[%s3 + $0x3b0] sm:$0xff]
      %v718 = vld [vmem:[%s3 + $0x3b8] sm:$0xff]
      %v719 = vld [vmem:[%s3 + $0x3c0] sm:$0xff]
      %v720 = vld [vmem:[%s3 + $0x3c8] sm:$0xff]
      %v721 = vld [vmem:[%s3 + $0x3d0] sm:$0xff]
      %v722 = vld [vmem:[%s3 + $0x3d8] sm:$0xff]
      %v723 = vld [vmem:[%s3 + $0x3e0] sm:$0xff]
      %v724 = vld [vmem:[%s3 + $0x3e8] sm:$0xff]
      %v725 = vld [vmem:[%s3 + $0x3f0] sm:$0xff]
      %v726 = vld [vmem:[%s3 + $0x3f8] sm:$0xff]
      %v727 = vld [vmem:[%s3 + $0x400] sm:$0xff]
      %v728 = vld [vmem:[%s3 + $0x408] sm:$0xff]
      %v729 = vld [vmem:[%s3 + $0x410] sm:$0xff]
      %v730 = vld [vmem:[%s3 + $0x418] sm:$0xff]
      %v731 = vld [vmem:[%s3 + $0x420] sm:$0xff]
      %v732 = vld [vmem:[%s3 + $0x428] sm:$0xff]
      %v733 = vld [vmem:[%s3 + $0x430] sm:$0xff]
      %v734 = vld [vmem:[%s3 + $0x438] sm:$0xff]
      %v735 = vld [vmem:[%s3 + $0x440] sm:$0xff]
      %v736 = vld [vmem:[%s3 + $0x448] sm:$0xff]
      %v737 = vld [vmem:[%s3 + $0x450] sm:$0xff]
      %v738 = vld [vmem:[%s3 + $0x458] sm:$0xff]
      %v739 = vld [vmem:[%s3 + $0x460] sm:$0xff]
      %v740 = vld [vmem:[%s3 + $0x468] sm:$0xff]
      %v741 = vld [vmem:[%s3 + $0x470] sm:$0xff]
      %v742 = vld [vmem:[%s3 + $0x478] sm:$0xff]
      %v743 = vld [vmem:[%s4] sm:$0x3]
      %v745 = vlaneseq
      %v746 = vshrl.u32 %v745, 7
      %v747 = vsub.s32 0, %v746
      %v748 = vrot.slane %v743, %v747
      %v749 = vlaneseq
      %v750 = vshrl.u32 %v749, 7
      %v751 = vsub.s32 1, %v750
      %v752 = vrot.slane %v743, %v751
      %v899 = vunpack.c.l.b16 %v599
      %v900 = vunpack.c.h.b16 %v599
      %v901 = vunpack.c.l.b16 %v600
      %v902 = vunpack.c.h.b16 %v600
      %v903 = vunpack.c.l.b16 %v601
      %v904 = vunpack.c.h.b16 %v601
      %v905 = vunpack.c.l.b16 %v602
      %v906 = vunpack.c.h.b16 %v602
      %v907 = vunpack.c.l.b16 %v603
      %v908 = vunpack.c.h.b16 %v603
      %v909 = vunpack.c.l.b16 %v604
      %v910 = vunpack.c.h.b16 %v604
      %v911 = vunpack.c.l.b16 %v605
      %v912 = vunpack.c.h.b16 %v605
      %v913 = vunpack.c.l.b16 %v606
      %v914 = vunpack.c.h.b16 %v606
      %v915 = vunpack.c.l.b16 %v607
      %v916 = vunpack.c.h.b16 %v607
      %v917 = vunpack.c.l.b16 %v608
      %v918 = vunpack.c.h.b16 %v608
      %v919 = vunpack.c.l.b16 %v609
      %v920 = vunpack.c.h.b16 %v609
      %v921 = vunpack.c.l.b16 %v610
      %v922 = vunpack.c.h.b16 %v610
      %v923 = vunpack.c.l.b16 %v611
      %v924 = vunpack.c.h.b16 %v611
      %v925 = vunpack.c.l.b16 %v612
      %v926 = vunpack.c.h.b16 %v612
      %v927 = vunpack.c.l.b16 %v613
      %v928 = vunpack.c.h.b16 %v613
      %v929 = vunpack.c.l.b16 %v614
      %v930 = vunpack.c.h.b16 %v614
      %v931 = vunpack.c.l.b16 %v615
      %v932 = vunpack.c.h.b16 %v615
      %v933 = vunpack.c.l.b16 %v616
      %v934 = vunpack.c.h.b16 %v616
      %v935 = vunpack.c.l.b16 %v617
      %v936 = vunpack.c.h.b16 %v617
      %v937 = vunpack.c.l.b16 %v618
      %v938 = vunpack.c.h.b16 %v618
      %v939 = vunpack.c.l.b16 %v619
      %v940 = vunpack.c.h.b16 %v619
      %v941 = vunpack.c.l.b16 %v620
      %v942 = vunpack.c.h.b16 %v620
      %v943 = vunpack.c.l.b16 %v621
      %v944 = vunpack.c.h.b16 %v621
      %v945 = vunpack.c.l.b16 %v622
      %v946 = vunpack.c.h.b16 %v622
      %v947 = vunpack.c.l.b16 %v623
      %v948 = vunpack.c.h.b16 %v623
      %v949 = vunpack.c.l.b16 %v624
      %v950 = vunpack.c.h.b16 %v624
      %v951 = vunpack.c.l.b16 %v625
      %v952 = vunpack.c.h.b16 %v625
      %v953 = vunpack.c.l.b16 %v626
      %v954 = vunpack.c.h.b16 %v626
      %v955 = vunpack.c.l.b16 %v627
      %v956 = vunpack.c.h.b16 %v627
      %v957 = vunpack.c.l.b16 %v628
      %v958 = vunpack.c.h.b16 %v628
      %v959 = vunpack.c.l.b16 %v629
      %v960 = vunpack.c.h.b16 %v629
      %v961 = vunpack.c.l.b16 %v630
      %v962 = vunpack.c.h.b16 %v630
      %v963 = vunpack.c.l.b16 %v631
      %v964 = vunpack.c.h.b16 %v631
      %v965 = vunpack.c.l.b16 %v632
      %v966 = vunpack.c.h.b16 %v632
      %v967 = vunpack.c.l.b16 %v633
      %v968 = vunpack.c.h.b16 %v633
      %v969 = vunpack.c.l.b16 %v634
      %v970 = vunpack.c.h.b16 %v634
      %v971 = vunpack.c.l.b16 %v635
      %v972 = vunpack.c.h.b16 %v635
      %v973 = vunpack.c.l.b16 %v636
      %v974 = vunpack.c.h.b16 %v636
      %v975 = vunpack.c.l.b16 %v637
      %v976 = vunpack.c.h.b16 %v637
      %v977 = vunpack.c.l.b16 %v638
      %v978 = vunpack.c.h.b16 %v638
      %v979 = vunpack.c.l.b16 %v639
      %v980 = vunpack.c.h.b16 %v639
      %v981 = vunpack.c.l.b16 %v640
      %v982 = vunpack.c.h.b16 %v640
      %v983 = vunpack.c.l.b16 %v641
      %v984 = vunpack.c.h.b16 %v641
      %v985 = vunpack.c.l.b16 %v642
      %v986 = vunpack.c.h.b16 %v642
      %v987 = vunpack.c.l.b16 %v643
      %v988 = vunpack.c.h.b16 %v643
      %v989 = vunpack.c.l.b16 %v644
      %v990 = vunpack.c.h.b16 %v644
      %v991 = vunpack.c.l.b16 %v645
      %v992 = vunpack.c.h.b16 %v645
      %v993 = vunpack.c.l.b16 %v646
      %v994 = vunpack.c.h.b16 %v646
      %v995 = vunpack.c.l.b16 %v647
      %v996 = vunpack.c.h.b16 %v647
      %v997 = vunpack.c.l.b16 %v648
      %v998 = vunpack.c.h.b16 %v648
      %v999 = vunpack.c.l.b16 %v649
      %v1000 = vunpack.c.h.b16 %v649
      %v1001 = vunpack.c.l.b16 %v650
      %v1002 = vunpack.c.h.b16 %v650
      %v1003 = vunpack.c.l.b16 %v651
      %v1004 = vunpack.c.h.b16 %v651
      %v1005 = vunpack.c.l.b16 %v652
      %v1006 = vunpack.c.h.b16 %v652
      %v1007 = vunpack.c.l.b16 %v653
      %v1008 = vunpack.c.h.b16 %v653
      %v1009 = vunpack.c.l.b16 %v654
      %v1010 = vunpack.c.h.b16 %v654
      %v1011 = vunpack.c.l.b16 %v655
      %v1012 = vunpack.c.h.b16 %v655
      %v1013 = vunpack.c.l.b16 %v656
      %v1014 = vunpack.c.h.b16 %v656
      %v1015 = vunpack.c.l.b16 %v657
      %v1016 = vunpack.c.h.b16 %v657
      %v1017 = vunpack.c.l.b16 %v658
      %v1018 = vunpack.c.h.b16 %v658
      %v1019 = vunpack.c.l.b16 %v659
      %v1020 = vunpack.c.h.b16 %v659
      %v1021 = vunpack.c.l.b16 %v660
      %v1022 = vunpack.c.h.b16 %v660
      %v1023 = vunpack.c.l.b16 %v661
      %v1024 = vunpack.c.h.b16 %v661
      %v1025 = vunpack.c.l.b16 %v662
      %v1026 = vunpack.c.h.b16 %v662
      %v1027 = vunpack.c.l.b16 %v663
      %v1028 = vunpack.c.h.b16 %v663
      %v1029 = vunpack.c.l.b16 %v664
      %v1030 = vunpack.c.h.b16 %v664
      %v1031 = vunpack.c.l.b16 %v665
      %v1032 = vunpack.c.h.b16 %v665
      %v1033 = vunpack.c.l.b16 %v666
      %v1034 = vunpack.c.h.b16 %v666
      %v1035 = vunpack.c.l.b16 %v667
      %v1036 = vunpack.c.h.b16 %v667
      %v1037 = vunpack.c.l.b16 %v668
      %v1038 = vunpack.c.h.b16 %v668
      %v1039 = vunpack.c.l.b16 %v669
      %v1040 = vunpack.c.h.b16 %v669
      %v1041 = vunpack.c.l.b16 %v670
      %v1042 = vunpack.c.h.b16 %v670
      %v1043 = vunpack.c.l.b16 %v671
      %v1044 = vunpack.c.h.b16 %v671
      %v1045 = vunpack.c.l.b16 %v672
      %v1046 = vunpack.c.h.b16 %v672
      %v1047 = vunpack.c.l.b16 %v673
      %v1048 = vunpack.c.h.b16 %v673
      %v1049 = vunpack.c.l.b16 %v674
      %v1050 = vunpack.c.h.b16 %v674
      %v1051 = vunpack.c.l.b16 %v675
      %v1052 = vunpack.c.h.b16 %v675
      %v1053 = vunpack.c.l.b16 %v676
      %v1054 = vunpack.c.h.b16 %v676
      %v1055 = vunpack.c.l.b16 %v677
      %v1056 = vunpack.c.h.b16 %v677
      %v1057 = vunpack.c.l.b16 %v678
      %v1058 = vunpack.c.h.b16 %v678
      %v1059 = vunpack.c.l.b16 %v679
      %v1060 = vunpack.c.h.b16 %v679
      %v1061 = vunpack.c.l.b16 %v680
      %v1062 = vunpack.c.h.b16 %v680
      %v1063 = vunpack.c.l.b16 %v681
      %v1064 = vunpack.c.h.b16 %v681
      %v1065 = vunpack.c.l.b16 %v682
      %v1066 = vunpack.c.h.b16 %v682
      %v1067 = vunpack.c.l.b16 %v683
      %v1068 = vunpack.c.h.b16 %v683
      %v1069 = vunpack.c.l.b16 %v684
      %v1070 = vunpack.c.h.b16 %v684
      %v1071 = vunpack.c.l.b16 %v685
      %v1072 = vunpack.c.h.b16 %v685
      %v1073 = vunpack.c.l.b16 %v686
      %v1074 = vunpack.c.h.b16 %v686
      %v1075 = vunpack.c.l.b16 %v687
      %v1076 = vunpack.c.h.b16 %v687
      %v1077 = vunpack.c.l.b16 %v688
      %v1078 = vunpack.c.h.b16 %v688
      %v1079 = vunpack.c.l.b16 %v689
      %v1080 = vunpack.c.h.b16 %v689
      %v1081 = vunpack.c.l.b16 %v690
      %v1082 = vunpack.c.h.b16 %v690
      %v1083 = vunpack.c.l.b16 %v691
      %v1084 = vunpack.c.h.b16 %v691
      %v1085 = vunpack.c.l.b16 %v692
      %v1086 = vunpack.c.h.b16 %v692
      %v1087 = vunpack.c.l.b16 %v693
      %v1088 = vunpack.c.h.b16 %v693
      %v1089 = vunpack.c.l.b16 %v694
      %v1090 = vunpack.c.h.b16 %v694
      %v1091 = vunpack.c.l.b16 %v695
      %v1092 = vunpack.c.h.b16 %v695
      %v1093 = vunpack.c.l.b16 %v696
      %v1094 = vunpack.c.h.b16 %v696
      %v1095 = vunpack.c.l.b16 %v697
      %v1096 = vunpack.c.h.b16 %v697
      %v1097 = vunpack.c.l.b16 %v698
      %v1098 = vunpack.c.h.b16 %v698
      %v1099 = vunpack.c.l.b16 %v699
      %v1100 = vunpack.c.h.b16 %v699
      %v1101 = vunpack.c.l.b16 %v700
      %v1102 = vunpack.c.h.b16 %v700
      %v1103 = vunpack.c.l.b16 %v701
      %v1104 = vunpack.c.h.b16 %v701
      %v1105 = vunpack.c.l.b16 %v702
      %v1106 = vunpack.c.h.b16 %v702
      %v1107 = vunpack.c.l.b16 %v703
      %v1108 = vunpack.c.h.b16 %v703
      %v1109 = vunpack.c.l.b16 %v704
      %v1110 = vunpack.c.h.b16 %v704
      %v1111 = vunpack.c.l.b16 %v705
      %v1112 = vunpack.c.h.b16 %v705
      %v1113 = vunpack.c.l.b16 %v706
      %v1114 = vunpack.c.h.b16 %v706
      %v1115 = vunpack.c.l.b16 %v707
      %v1116 = vunpack.c.h.b16 %v707
      %v1117 = vunpack.c.l.b16 %v708
      %v1118 = vunpack.c.h.b16 %v708
      %v1119 = vunpack.c.l.b16 %v709
      %v1120 = vunpack.c.h.b16 %v709
      %v1121 = vunpack.c.l.b16 %v710
      %v1122 = vunpack.c.h.b16 %v710
      %v1123 = vunpack.c.l.b16 %v711
      %v1124 = vunpack.c.h.b16 %v711
      %v1125 = vunpack.c.l.b16 %v712
      %v1126 = vunpack.c.h.b16 %v712
      %v1127 = vunpack.c.l.b16 %v713
      %v1128 = vunpack.c.h.b16 %v713
      %v1129 = vunpack.c.l.b16 %v714
      %v1130 = vunpack.c.h.b16 %v714
      %v1131 = vunpack.c.l.b16 %v715
      %v1132 = vunpack.c.h.b16 %v715
      %v1133 = vunpack.c.l.b16 %v716
      %v1134 = vunpack.c.h.b16 %v716
      %v1135 = vunpack.c.l.b16 %v717
      %v1136 = vunpack.c.h.b16 %v717
      %v1137 = vunpack.c.l.b16 %v718
      %v1138 = vunpack.c.h.b16 %v718
      %v1139 = vunpack.c.l.b16 %v719
      %v1140 = vunpack.c.h.b16 %v719
      %v1141 = vunpack.c.l.b16 %v720
      %v1142 = vunpack.c.h.b16 %v720
      %v1143 = vunpack.c.l.b16 %v721
      %v1144 = vunpack.c.h.b16 %v721
      %v1145 = vunpack.c.l.b16 %v722
      %v1146 = vunpack.c.h.b16 %v722
      %v1147 = vunpack.c.l.b16 %v723
      %v1148 = vunpack.c.h.b16 %v723
      %v1149 = vunpack.c.l.b16 %v724
      %v1150 = vunpack.c.h.b16 %v724
      %v1151 = vunpack.c.l.b16 %v725
      %v1152 = vunpack.c.h.b16 %v725
      %v1153 = vunpack.c.l.b16 %v726
      %v1154 = vunpack.c.h.b16 %v726
      %v1155 = vunpack.c.l.b16 %v727
      %v1156 = vunpack.c.h.b16 %v727
      %v1157 = vunpack.c.l.b16 %v728
      %v1158 = vunpack.c.h.b16 %v728
      %v1159 = vunpack.c.l.b16 %v729
      %v1160 = vunpack.c.h.b16 %v729
      %v1161 = vunpack.c.l.b16 %v730
      %v1162 = vunpack.c.h.b16 %v730
      %v1163 = vunpack.c.l.b16 %v731
      %v1164 = vunpack.c.h.b16 %v731
      %v1165 = vunpack.c.l.b16 %v732
      %v1166 = vunpack.c.h.b16 %v732
      %v1167 = vunpack.c.l.b16 %v733
      %v1168 = vunpack.c.h.b16 %v733
      %v1169 = vunpack.c.l.b16 %v734
      %v1170 = vunpack.c.h.b16 %v734
      %v1171 = vunpack.c.l.b16 %v735
      %v1172 = vunpack.c.h.b16 %v735
      %v1173 = vunpack.c.l.b16 %v736
      %v1174 = vunpack.c.h.b16 %v736
      %v1175 = vunpack.c.l.b16 %v737
      %v1176 = vunpack.c.h.b16 %v737
      %v1177 = vunpack.c.l.b16 %v738
      %v1178 = vunpack.c.h.b16 %v738
      %v1179 = vunpack.c.l.b16 %v739
      %v1180 = vunpack.c.h.b16 %v739
      %v1181 = vunpack.c.l.b16 %v740
      %v1182 = vunpack.c.h.b16 %v740
      %v1183 = vunpack.c.l.b16 %v741
      %v1184 = vunpack.c.h.b16 %v741
      %v1185 = vunpack.c.l.b16 %v742
      %v1186 = vunpack.c.h.b16 %v742
      %v1187 = vpack.c.b16 %v901, %v899
      %v1188 = vpack.c.b16 %v902, %v900
      %v1189 = vpack.c.b16 %v905, %v903
      %v1190 = vpack.c.b16 %v906, %v904
      %v1191 = vpack.c.b16 %v909, %v907
      %v1192 = vpack.c.b16 %v910, %v908
      %v1193 = vpack.c.b16 %v913, %v911
      %v1194 = vpack.c.b16 %v914, %v912
      %v1195 = vpack.c.b16 %v917, %v915
      %v1196 = vpack.c.b16 %v918, %v916
      %v1197 = vpack.c.b16 %v921, %v919
      %v1198 = vpack.c.b16 %v922, %v920
      %v1199 = vpack.c.b16 %v925, %v923
      %v1200 = vpack.c.b16 %v926, %v924
      %v1201 = vpack.c.b16 %v929, %v927
      %v1202 = vpack.c.b16 %v930, %v928
      %v1203 = vpack.c.b16 %v933, %v931
      %v1204 = vpack.c.b16 %v934, %v932
      %v1205 = vpack.c.b16 %v937, %v935
      %v1206 = vpack.c.b16 %v938, %v936
      %v1207 = vpack.c.b16 %v941, %v939
      %v1208 = vpack.c.b16 %v942, %v940
      %v1209 = vpack.c.b16 %v945, %v943
      %v1210 = vpack.c.b16 %v946, %v944
      %v1211 = vpack.c.b16 %v949, %v947
      %v1212 = vpack.c.b16 %v950, %v948
      %v1213 = vpack.c.b16 %v953, %v951
      %v1214 = vpack.c.b16 %v954, %v952
      %v1215 = vpack.c.b16 %v957, %v955
      %v1216 = vpack.c.b16 %v958, %v956
      %v1217 = vpack.c.b16 %v961, %v959
      %v1218 = vpack.c.b16 %v962, %v960
      %v1219 = vpack.c.b16 %v965, %v963
      %v1220 = vpack.c.b16 %v966, %v964
      %v1221 = vpack.c.b16 %v969, %v967
      %v1222 = vpack.c.b16 %v970, %v968
      %v1223 = vpack.c.b16 %v973, %v971
      %v1224 = vpack.c.b16 %v974, %v972
      %v1225 = vpack.c.b16 %v977, %v975
      %v1226 = vpack.c.b16 %v978, %v976
      %v1227 = vpack.c.b16 %v981, %v979
      %v1228 = vpack.c.b16 %v982, %v980
      %v1229 = vpack.c.b16 %v985, %v983
      %v1230 = vpack.c.b16 %v986, %v984
      %v1231 = vpack.c.b16 %v989, %v987
      %v1232 = vpack.c.b16 %v990, %v988
      %v1233 = vpack.c.b16 %v993, %v991
      %v1234 = vpack.c.b16 %v994, %v992
      %v1235 = vpack.c.b16 %v997, %v995
      %v1236 = vpack.c.b16 %v998, %v996
      %v1237 = vpack.c.b16 %v1001, %v999
      %v1238 = vpack.c.b16 %v1002, %v1000
      %v1239 = vpack.c.b16 %v1005, %v1003
      %v1240 = vpack.c.b16 %v1006, %v1004
      %v1241 = vpack.c.b16 %v1009, %v1007
      %v1242 = vpack.c.b16 %v1010, %v1008
      %v1243 = vpack.c.b16 %v1013, %v1011
      %v1244 = vpack.c.b16 %v1014, %v1012
      %v1245 = vpack.c.b16 %v1017, %v1015
      %v1246 = vpack.c.b16 %v1018, %v1016
      %v1247 = vpack.c.b16 %v1021, %v1019
      %v1248 = vpack.c.b16 %v1022, %v1020
      %v1249 = vpack.c.b16 %v1025, %v1023
      %v1250 = vpack.c.b16 %v1026, %v1024
      %v1251 = vpack.c.b16 %v1029, %v1027
      %v1252 = vpack.c.b16 %v1030, %v1028
      %v1253 = vpack.c.b16 %v1033, %v1031
      %v1254 = vpack.c.b16 %v1034, %v1032
      %v1255 = vpack.c.b16 %v1037, %v1035
      %v1256 = vpack.c.b16 %v1038, %v1036
      %v1257 = vpack.c.b16 %v1041, %v1039
      %v1258 = vpack.c.b16 %v1042, %v1040
      %v1259 = vpack.c.b16 %v1045, %v1043
      %v1260 = vpack.c.b16 %v1046, %v1044
      %v1261 = vpack.c.b16 %v1049, %v1047
      %v1262 = vpack.c.b16 %v1050, %v1048
      %v1263 = vpack.c.b16 %v1053, %v1051
      %v1264 = vpack.c.b16 %v1054, %v1052
      %v1265 = vpack.c.b16 %v1057, %v1055
      %v1266 = vpack.c.b16 %v1058, %v1056
      %v1267 = vpack.c.b16 %v1061, %v1059
      %v1268 = vpack.c.b16 %v1062, %v1060
      %v1269 = vpack.c.b16 %v1065, %v1063
      %v1270 = vpack.c.b16 %v1066, %v1064
      %v1271 = vpack.c.b16 %v1069, %v1067
      %v1272 = vpack.c.b16 %v1070, %v1068
      %v1273 = vpack.c.b16 %v1073, %v1071
      %v1274 = vpack.c.b16 %v1074, %v1072
      %v1275 = vpack.c.b16 %v1077, %v1075
      %v1276 = vpack.c.b16 %v1078, %v1076
      %v1277 = vpack.c.b16 %v1081, %v1079
      %v1278 = vpack.c.b16 %v1082, %v1080
      %v1279 = vpack.c.b16 %v1085, %v1083
      %v1280 = vpack.c.b16 %v1086, %v1084
      %v1281 = vpack.c.b16 %v1089, %v1087
      %v1282 = vpack.c.b16 %v1090, %v1088
      %v1283 = vpack.c.b16 %v1093, %v1091
      %v1284 = vpack.c.b16 %v1094, %v1092
      %v1285 = vpack.c.b16 %v1097, %v1095
      %v1286 = vpack.c.b16 %v1098, %v1096
      %v1287 = vpack.c.b16 %v1101, %v1099
      %v1288 = vpack.c.b16 %v1102, %v1100
      %v1289 = vpack.c.b16 %v1105, %v1103
      %v1290 = vpack.c.b16 %v1106, %v1104
      %v1291 = vpack.c.b16 %v1109, %v1107
      %v1292 = vpack.c.b16 %v1110, %v1108
      %v1293 = vpack.c.b16 %v1113, %v1111
      %v1294 = vpack.c.b16 %v1114, %v1112
      %v1295 = vpack.c.b16 %v1117, %v1115
      %v1296 = vpack.c.b16 %v1118, %v1116
      %v1297 = vpack.c.b16 %v1121, %v1119
      %v1298 = vpack.c.b16 %v1122, %v1120
      %v1299 = vpack.c.b16 %v1125, %v1123
      %v1300 = vpack.c.b16 %v1126, %v1124
      %v1301 = vpack.c.b16 %v1129, %v1127
      %v1302 = vpack.c.b16 %v1130, %v1128
      %v1303 = vpack.c.b16 %v1133, %v1131
      %v1304 = vpack.c.b16 %v1134, %v1132
      %v1305 = vpack.c.b16 %v1137, %v1135
      %v1306 = vpack.c.b16 %v1138, %v1136
      %v1307 = vpack.c.b16 %v1141, %v1139
      %v1308 = vpack.c.b16 %v1142, %v1140
      %v1309 = vpack.c.b16 %v1145, %v1143
      %v1310 = vpack.c.b16 %v1146, %v1144
      %v1311 = vpack.c.b16 %v1149, %v1147
      %v1312 = vpack.c.b16 %v1150, %v1148
      %v1313 = vpack.c.b16 %v1153, %v1151
      %v1314 = vpack.c.b16 %v1154, %v1152
      %v1315 = vpack.c.b16 %v1157, %v1155
      %v1316 = vpack.c.b16 %v1158, %v1156
      %v1317 = vpack.c.b16 %v1161, %v1159
      %v1318 = vpack.c.b16 %v1162, %v1160
      %v1319 = vpack.c.b16 %v1165, %v1163
      %v1320 = vpack.c.b16 %v1166, %v1164
      %v1321 = vpack.c.b16 %v1169, %v1167
      %v1322 = vpack.c.b16 %v1170, %v1168
      %v1323 = vpack.c.b16 %v1173, %v1171
      %v1324 = vpack.c.b16 %v1174, %v1172
      %v1325 = vpack.c.b16 %v1177, %v1175
      %v1326 = vpack.c.b16 %v1178, %v1176
      %v1327 = vpack.c.b16 %v1181, %v1179
      %v1328 = vpack.c.b16 %v1182, %v1180
      %v1329 = vpack.c.b16 %v1185, %v1183
      %v1330 = vpack.c.b16 %v1186, %v1184
      %1475 = vmatprep.subr.bf16.mxu0 %v1202
      %1476 = vmatpush1.bf16.msra.mxu0 %v1201
      %1477 = vmatprep.subr.bf16.mxu0 %v1200
      %1478 = vmatpush1.bf16.msra.mxu0 %v1199
      %1479 = vmatprep.subr.bf16.mxu0 %v1198
      %1480 = vmatpush1.bf16.msra.mxu0 %v1197
      %1481 = vmatprep.subr.bf16.mxu0 %v1196
      %1482 = vmatpush1.bf16.msra.mxu0 %v1195
      %1483 = vmatprep.subr.bf16.mxu0 %v1194
      %1484 = vmatpush1.bf16.msra.mxu0 %v1193
      %1485 = vmatprep.subr.bf16.mxu0 %v1192
      %1486 = vmatpush1.bf16.msra.mxu0 %v1191
      %1487 = vmatprep.subr.bf16.mxu0 %v1190
      %1488 = vmatpush1.bf16.msra.mxu0 %v1189
      %1489 = vmatprep.subr.bf16.mxu0 %v1188
      %1490 = vmatpush1.bf16.msra.mxu0 %v1187
      %1491 = vmatprep.subr.bf16.mxu0 %v1218
      %1492 = vmatpush2.bf16.msra.mxu0 %v1217
      %1493 = vmatprep.subr.bf16.mxu0 %v1216
      %1494 = vmatpush2.bf16.msra.mxu0 %v1215
      %1495 = vmatprep.subr.bf16.mxu0 %v1214
      %1496 = vmatpush2.bf16.msra.mxu0 %v1213
      %1497 = vmatprep.subr.bf16.mxu0 %v1212
      %1498 = vmatpush2.bf16.msra.mxu0 %v1211
      %1499 = vmatprep.subr.bf16.mxu0 %v1210
      %1500 = vmatpush2.bf16.msra.mxu0 %v1209
      %1501 = vmatprep.subr.bf16.mxu0 %v1208
      %1502 = vmatpush2.bf16.msra.mxu0 %v1207
      %1503 = vmatprep.subr.bf16.mxu0 %v1206
      %1504 = vmatpush2.bf16.msra.mxu0 %v1205
      %1505 = vmatprep.subr.bf16.mxu0 %v1204
      %1506 = vmatpush2.bf16.msra.mxu0 %v1203
      %1507 = vmatprep.mubr.bf16.mxu0 %v591
      %1508 = vmatmul.mubr.bf16.gmra.mxu0 %v590
      %v1509 = vpop.f32.mrf.mxu0
      %v1510 = vadd.f32 %v748, %v1509
      %v1511 = vpop.f32.mrf.mxu0
      %v1512 = vadd.f32 %v752, %v1511
      %v1513 = vpop.f32.mrf.mxu0
      %v1514 = vpop.f32.mrf.mxu0
      %1515 = vdwg.mxu0
      %1516 = vmatprep.subr.bf16.mxu0 %v1234
      %1517 = vmatpush1.bf16.msra.mxu0 %v1233
      %1518 = vmatprep.subr.bf16.mxu0 %v1232
      %1519 = vmatpush1.bf16.msra.mxu0 %v1231
      %1520 = vmatprep.subr.bf16.mxu0 %v1230
      %1521 = vmatpush1.bf16.msra.mxu0 %v1229
      %1522 = vmatprep.subr.bf16.mxu0 %v1228
      %1523 = vmatpush1.bf16.msra.mxu0 %v1227
      %1524 = vmatprep.subr.bf16.mxu0 %v1226
      %1525 = vmatpush1.bf16.msra.mxu0 %v1225
      %1526 = vmatprep.subr.bf16.mxu0 %v1224
      %1527 = vmatpush1.bf16.msra.mxu0 %v1223
      %1528 = vmatprep.subr.bf16.mxu0 %v1222
      %1529 = vmatpush1.bf16.msra.mxu0 %v1221
      %1530 = vmatprep.subr.bf16.mxu0 %v1220
      %1531 = vmatpush1.bf16.msra.mxu0 %v1219
      %1532 = vmatprep.subr.bf16.mxu0 %v1250
      %1533 = vmatpush2.bf16.msra.mxu0 %v1249
      %1534 = vmatprep.subr.bf16.mxu0 %v1248
      %1535 = vmatpush2.bf16.msra.mxu0 %v1247
      %1536 = vmatprep.subr.bf16.mxu0 %v1246
      %1537 = vmatpush2.bf16.msra.mxu0 %v1245
      %1538 = vmatprep.subr.bf16.mxu0 %v1244
      %1539 = vmatpush2.bf16.msra.mxu0 %v1243
      %1540 = vmatprep.subr.bf16.mxu0 %v1242
      %1541 = vmatpush2.bf16.msra.mxu0 %v1241
      %1542 = vmatprep.subr.bf16.mxu0 %v1240
      %1543 = vmatpush2.bf16.msra.mxu0 %v1239
      %1544 = vmatprep.subr.bf16.mxu0 %v1238
      %1545 = vmatpush2.bf16.msra.mxu0 %v1237
      %1546 = vmatprep.subr.bf16.mxu0 %v1236
      %1547 = vmatpush2.bf16.msra.mxu0 %v1235
      %1548 = vmatprep.mubr.bf16.mxu0 %v593
      %1549 = vmatmul.mubr.bf16.gmra.mxu0 %v592
      %v1550 = vpop.f32.mrf.mxu0
      %v1551 = vadd.f32 %v1510, %v1550
      %v1552 = vpop.f32.mrf.mxu0
      %v1553 = vadd.f32 %v1512, %v1552
      %v1554 = vpop.f32.mrf.mxu0
      %v1555 = vpop.f32.mrf.mxu0
      %1556 = vdwg.mxu0
      %1557 = vmatprep.subr.bf16.mxu0 %v1266
      %1558 = vmatpush1.bf16.msra.mxu0 %v1265
      %1559 = vmatprep.subr.bf16.mxu0 %v1264
      %1560 = vmatpush1.bf16.msra.mxu0 %v1263
      %1561 = vmatprep.subr.bf16.mxu0 %v1262
      %1562 = vmatpush1.bf16.msra.mxu0 %v1261
      %1563 = vmatprep.subr.bf16.mxu0 %v1260
      %1564 = vmatpush1.bf16.msra.mxu0 %v1259
      %1565 = vmatprep.subr.bf16.mxu0 %v1258
      %1566 = vmatpush1.bf16.msra.mxu0 %v1257
      %1567 = vmatprep.subr.bf16.mxu0 %v1256
      %1568 = vmatpush1.bf16.msra.mxu0 %v1255
      %1569 = vmatprep.subr.bf16.mxu0 %v1254
      %1570 = vmatpush1.bf16.msra.mxu0 %v1253
      %1571 = vmatprep.subr.bf16.mxu0 %v1252
      %1572 = vmatpush1.bf16.msra.mxu0 %v1251
      %1573 = vmatprep.subr.bf16.mxu0 %v1282
      %1574 = vmatpush2.bf16.msra.mxu0 %v1281
      %1575 = vmatprep.subr.bf16.mxu0 %v1280
      %1576 = vmatpush2.bf16.msra.mxu0 %v1279
      %1577 = vmatprep.subr.bf16.mxu0 %v1278
      %1578 = vmatpush2.bf16.msra.mxu0 %v1277
      %1579 = vmatprep.subr.bf16.mxu0 %v1276
      %1580 = vmatpush2.bf16.msra.mxu0 %v1275
      %1581 = vmatprep.subr.bf16.mxu0 %v1274
      %1582 = vmatpush2.bf16.msra.mxu0 %v1273
      %1583 = vmatprep.subr.bf16.mxu0 %v1272
      %1584 = vmatpush2.bf16.msra.mxu0 %v1271
      %1585 = vmatprep.subr.bf16.mxu0 %v1270
      %1586 = vmatpush2.bf16.msra.mxu0 %v1269
      %1587 = vmatprep.subr.bf16.mxu0 %v1268
      %1588 = vmatpush2.bf16.msra.mxu0 %v1267
      %1589 = vmatprep.mubr.bf16.mxu0 %v595
      %1590 = vmatmul.mubr.bf16.gmra.mxu0 %v594
      %v1591 = vpop.f32.mrf.mxu0
      %v1592 = vadd.f32 %v1551, %v1591
      %v1593 = vpop.f32.mrf.mxu0
      %v1594 = vadd.f32 %v1553, %v1593
      %v1595 = vpop.f32.mrf.mxu0
      %v1596 = vpop.f32.mrf.mxu0
      %1597 = vdwg.mxu0
      %1598 = vmatprep.subr.bf16.mxu0 %v1298
      %1599 = vmatpush1.bf16.msra.mxu0 %v1297
      %1600 = vmatprep.subr.bf16.mxu0 %v1296
      %1601 = vmatpush1.bf16.msra.mxu0 %v1295
      %1602 = vmatprep.subr.bf16.mxu0 %v1294
      %1603 = vmatpush1.bf16.msra.mxu0 %v1293
      %1604 = vmatprep.subr.bf16.mxu0 %v1292
      %1605 = vmatpush1.bf16.msra.mxu0 %v1291
      %1606 = vmatprep.subr.bf16.mxu0 %v1290
      %1607 = vmatpush1.bf16.msra.mxu0 %v1289
      %1608 = vmatprep.subr.bf16.mxu0 %v1288
      %1609 = vmatpush1.bf16.msra.mxu0 %v1287
      %1610 = vmatprep.subr.bf16.mxu0 %v1286
      %1611 = vmatpush1.bf16.msra.mxu0 %v1285
      %1612 = vmatprep.subr.bf16.mxu0 %v1284
      %1613 = vmatpush1.bf16.msra.mxu0 %v1283
      %1614 = vmatprep.subr.bf16.mxu0 %v1314
      %1615 = vmatpush2.bf16.msra.mxu0 %v1313
      %1616 = vmatprep.subr.bf16.mxu0 %v1312
      %1617 = vmatpush2.bf16.msra.mxu0 %v1311
      %1618 = vmatprep.subr.bf16.mxu0 %v1310
      %1619 = vmatpush2.bf16.msra.mxu0 %v1309
      %1620 = vmatprep.subr.bf16.mxu0 %v1308
      %1621 = vmatpush2.bf16.msra.mxu0 %v1307
      %1622 = vmatprep.subr.bf16.mxu0 %v1306
      %1623 = vmatpush2.bf16.msra.mxu0 %v1305
      %1624 = vmatprep.subr.bf16.mxu0 %v1304
      %1625 = vmatpush2.bf16.msra.mxu0 %v1303
      %1626 = vmatprep.subr.bf16.mxu0 %v1302
      %1627 = vmatpush2.bf16.msra.mxu0 %v1301
      %1628 = vmatprep.subr.bf16.mxu0 %v1300
      %1629 = vmatpush2.bf16.msra.mxu0 %v1299
      %1630 = vmatprep.mubr.bf16.mxu0 %v597
      %1631 = vmatmul.mubr.bf16.gmra.mxu0 %v596
      %v1632 = vpop.f32.mrf.mxu0
      %v1633 = vadd.f32 %v1592, %v1632
      %v1634 = vpop.f32.mrf.mxu0
      %v1635 = vadd.f32 %v1594, %v1634
      %v1636 = vpop.f32.mrf.mxu0
      %v1637 = vpop.f32.mrf.mxu0
      %1638 = vdwg.mxu0
      %1639 = vmatprep.subr.bf16.mxu0 %v1330
      %1640 = vmatpush1.bf16.msra.mxu0 %v1329
      %1641 = vmatprep.subr.bf16.mxu0 %v1328
      %1642 = vmatpush1.bf16.msra.mxu0 %v1327
      %1643 = vmatprep.subr.bf16.mxu0 %v1326
      %1644 = vmatpush1.bf16.msra.mxu0 %v1325
      %1645 = vmatprep.subr.bf16.mxu0 %v1324
      %1646 = vmatpush1.bf16.msra.mxu0 %v1323
      %1647 = vmatprep.subr.bf16.mxu0 %v1322
      %1648 = vmatpush1.bf16.msra.mxu0 %v1321
      %1649 = vmatprep.subr.bf16.mxu0 %v1320
      %1650 = vmatpush1.bf16.msra.mxu0 %v1319
      %1651 = vmatprep.subr.bf16.mxu0 %v1318
      %1652 = vmatpush1.bf16.msra.mxu0 %v1317
      %1653 = vmatprep.subr.bf16.mxu0 %v1316
      %1654 = vmatpush1.bf16.msra.mxu0 %v1315
      %1655 = vmatprep.subr.bf16.mxu0 0
      %1656 = vmatpush2.bf16.msra.mxu0 0
      %1657 = vmatprep.subr.bf16.mxu0 0
      %1658 = vmatpush2.bf16.msra.mxu0 0
      %1659 = vmatprep.subr.bf16.mxu0 0
      %1660 = vmatpush2.bf16.msra.mxu0 0
      %1661 = vmatprep.subr.bf16.mxu0 0
      %1662 = vmatpush2.bf16.msra.mxu0 0
      %1663 = vmatprep.subr.bf16.mxu0 0
      %1664 = vmatpush2.bf16.msra.mxu0 0
      %1665 = vmatprep.subr.bf16.mxu0 0
      %1666 = vmatpush2.bf16.msra.mxu0 0
      %1667 = vmatprep.subr.bf16.mxu0 0
      %1668 = vmatpush2.bf16.msra.mxu0 0
      %1669 = vmatprep.subr.bf16.mxu0 0
      %1670 = vmatpush2.bf16.msra.mxu0 0
      %1671 = vmatprep.mubr.bf16.mxu0 0
      %1672 = vmatmul.mubr.bf16.gmra.mxu0 %v598
      %v1673 = vpop.f32.mrf.mxu0
      %v1674 = vadd.f32 %v1633, %v1673
      %v1675 = vpop.f32.mrf.mxu0
      %v1676 = vadd.f32 %v1635, %v1675
      %v1677 = vpop.f32.mrf.mxu0
      %v1678 = vpop.f32.mrf.mxu0
      %1679 = vdwg.mxu0
      %v1680 = vmul.f32 %v1674, 0.5
      %v1681 = vmul.f32 %v1676, 0.5
      %v1682 = vmul.f32 %v1674, 0.044715
      %v1683 = vmul.f32 %v1676, 0.044715
      %v1684 = vmul.f32 %v1682, %v1674
      %v1685 = vmul.f32 %v1683, %v1676
      %v1686 = vmul.f32 %v1684, %v1674
      %v1687 = vmul.f32 %v1685, %v1676
      %v1688 = vadd.f32 %v1674, %v1686
      %v1689 = vadd.f32 %v1676, %v1687
      %v1690 = vmul.f32 %v1688, 0.7978846
      %v1691 = vmul.f32 %v1689, 0.7978846
      %v1692 = vtanh.pop %v1690
      %v1693 = vtanh.pop %v1691
      %v1694 = vadd.f32 %v1692, 1.0
      %v1695 = vadd.f32 %v1693, 1.0
      %v1696 = vmul.f32 %v1680, %v1694
      %v1697 = vmul.f32 %v1681, %v1695
      %v1698 = vrot.slane %v1696, 4
      %v1699 = vadd.f32 %v1696, %v1698
      %v1700 = vrot.slane %v1699, 2
      %v1701 = vadd.f32 %v1699, %v1700
      %v1702 = vrot.slane %v1701, 1
      %v1703 = vadd.f32 %v1701, %v1702
      %v1704 = vrot.slane %v1697, 4
      %v1705 = vadd.f32 %v1697, %v1704
      %v1706 = vrot.slane %v1705, 2
      %v1707 = vadd.f32 %v1705, %v1706
      %v1708 = vrot.slane %v1707, 1
      %v1709 = vadd.f32 %v1707, %v1708
      %v1710 = vpack.c.bf16 %v1703, %v1703
      %v1711 = vpack.c.bf16 %v1709, %v1709
      %v1712 = vld [vmem:[%s5] sm:$0xff]
      %v1713 = vld [vmem:[%s5 + $0x8] sm:$0xff]
      %v1714 = vld [vmem:[%s5 + $0x10] sm:$0xff]
      %v1715 = vld [vmem:[%s5 + $0x18] sm:$0xff]
      %v1716 = vld [vmem:[%s5 + $0x20] sm:$0xff]
      %v1717 = vld [vmem:[%s5 + $0x28] sm:$0xff]
      %v1718 = vld [vmem:[%s5 + $0x30] sm:$0xff]
      %v1719 = vld [vmem:[%s5 + $0x38] sm:$0xff]
      %v1720 = vld [vmem:[%s5 + $0x40] sm:$0xff]
      %v1721 = vld [vmem:[%s5 + $0x48] sm:$0xff]
      %v1722 = vld [vmem:[%s5 + $0x50] sm:$0xff]
      %v1723 = vld [vmem:[%s5 + $0x58] sm:$0xff]
      %v1724 = vld [vmem:[%s5 + $0x60] sm:$0xff]
      %v1725 = vld [vmem:[%s5 + $0x68] sm:$0xff]
      %v1726 = vld [vmem:[%s5 + $0x70] sm:$0xff]
      %v1727 = vld [vmem:[%s5 + $0x78] sm:$0xff]
      %v1728 = vld [vmem:[%s5 + $0x80] sm:$0xff]
      %v1729 = vld [vmem:[%s5 + $0x88] sm:$0xff]
      %v1730 = vld [vmem:[%s5 + $0x90] sm:$0xff]
      %v1731 = vld [vmem:[%s5 + $0x98] sm:$0xff]
      %v1732 = vld [vmem:[%s5 + $0xa0] sm:$0xff]
      %v1733 = vld [vmem:[%s5 + $0xa8] sm:$0xff]
      %v1734 = vld [vmem:[%s5 + $0xb0] sm:$0xff]
      %v1735 = vld [vmem:[%s5 + $0xb8] sm:$0xff]
      %v1736 = vld [vmem:[%s5 + $0xc0] sm:$0xff]
      %v1737 = vld [vmem:[%s5 + $0xc8] sm:$0xff]
      %v1738 = vld [vmem:[%s5 + $0xd0] sm:$0xff]
      %v1739 = vld [vmem:[%s5 + $0xd8] sm:$0xff]
      %v1740 = vld [vmem:[%s5 + $0xe0] sm:$0xff]
      %v1741 = vld [vmem:[%s5 + $0xe8] sm:$0xff]
      %v1742 = vld [vmem:[%s5 + $0xf0] sm:$0xff]
      %v1743 = vld [vmem:[%s5 + $0xf8] sm:$0xff]
      %v1744 = vld [vmem:[%s6] sm:$0x3]
      %v1777 = vunpack.c.l.b16 %v1712
      %v1778 = vunpack.c.h.b16 %v1712
      %v1779 = vunpack.c.l.b16 %v1713
      %v1780 = vunpack.c.h.b16 %v1713
      %v1781 = vunpack.c.l.b16 %v1714
      %v1782 = vunpack.c.h.b16 %v1714
      %v1783 = vunpack.c.l.b16 %v1715
      %v1784 = vunpack.c.h.b16 %v1715
      %v1785 = vunpack.c.l.b16 %v1716
      %v1786 = vunpack.c.h.b16 %v1716
      %v1787 = vunpack.c.l.b16 %v1717
      %v1788 = vunpack.c.h.b16 %v1717
      %v1789 = vunpack.c.l.b16 %v1718
      %v1790 = vunpack.c.h.b16 %v1718
      %v1791 = vunpack.c.l.b16 %v1719
      %v1792 = vunpack.c.h.b16 %v1719
      %v1793 = vunpack.c.l.b16 %v1720
      %v1794 = vunpack.c.h.b16 %v1720
      %v1795 = vunpack.c.l.b16 %v1721
      %v1796 = vunpack.c.h.b16 %v1721
      %v1797 = vunpack.c.l.b16 %v1722
      %v1798 = vunpack.c.h.b16 %v1722
      %v1799 = vunpack.c.l.b16 %v1723
      %v1800 = vunpack.c.h.b16 %v1723
      %v1801 = vunpack.c.l.b16 %v1724
      %v1802 = vunpack.c.h.b16 %v1724
      %v1803 = vunpack.c.l.b16 %v1725
      %v1804 = vunpack.c.h.b16 %v1725
      %v1805 = vunpack.c.l.b16 %v1726
      %v1806 = vunpack.c.h.b16 %v1726
      %v1807 = vunpack.c.l.b16 %v1727
      %v1808 = vunpack.c.h.b16 %v1727
      %v1809 = vunpack.c.l.b16 %v1728
      %v1810 = vunpack.c.h.b16 %v1728
      %v1811 = vunpack.c.l.b16 %v1729
      %v1812 = vunpack.c.h.b16 %v1729
      %v1813 = vunpack.c.l.b16 %v1730
      %v1814 = vunpack.c.h.b16 %v1730
      %v1815 = vunpack.c.l.b16 %v1731
      %v1816 = vunpack.c.h.b16 %v1731
      %v1817 = vunpack.c.l.b16 %v1732
      %v1818 = vunpack.c.h.b16 %v1732
      %v1819 = vunpack.c.l.b16 %v1733
      %v1820 = vunpack.c.h.b16 %v1733
      %v1821 = vunpack.c.l.b16 %v1734
      %v1822 = vunpack.c.h.b16 %v1734
      %v1823 = vunpack.c.l.b16 %v1735
      %v1824 = vunpack.c.h.b16 %v1735
      %v1825 = vunpack.c.l.b16 %v1736
      %v1826 = vunpack.c.h.b16 %v1736
      %v1827 = vunpack.c.l.b16 %v1737
      %v1828 = vunpack.c.h.b16 %v1737
      %v1829 = vunpack.c.l.b16 %v1738
      %v1830 = vunpack.c.h.b16 %v1738
      %v1831 = vunpack.c.l.b16 %v1739
      %v1832 = vunpack.c.h.b16 %v1739
      %v1833 = vunpack.c.l.b16 %v1740
      %v1834 = vunpack.c.h.b16 %v1740
      %v1835 = vunpack.c.l.b16 %v1741
      %v1836 = vunpack.c.h.b16 %v1741
      %v1837 = vunpack.c.l.b16 %v1742
      %v1838 = vunpack.c.h.b16 %v1742
      %v1839 = vunpack.c.l.b16 %v1743
      %v1840 = vunpack.c.h.b16 %v1743
      %v1841 = vpack.c.b16 %v1779, %v1777
      %v1842 = vpack.c.b16 %v1780, %v1778
      %v1843 = vpack.c.b16 %v1783, %v1781
      %v1844 = vpack.c.b16 %v1784, %v1782
      %v1845 = vpack.c.b16 %v1787, %v1785
      %v1846 = vpack.c.b16 %v1788, %v1786
      %v1847 = vpack.c.b16 %v1791, %v1789
      %v1848 = vpack.c.b16 %v1792, %v1790
      %v1849 = vpack.c.b16 %v1795, %v1793
      %v1850 = vpack.c.b16 %v1796, %v1794
      %v1851 = vpack.c.b16 %v1799, %v1797
      %v1852 = vpack.c.b16 %v1800, %v1798
      %v1853 = vpack.c.b16 %v1803, %v1801
      %v1854 = vpack.c.b16 %v1804, %v1802
      %v1855 = vpack.c.b16 %v1807, %v1805
      %v1856 = vpack.c.b16 %v1808, %v1806
      %v1857 = vpack.c.b16 %v1811, %v1809
      %v1858 = vpack.c.b16 %v1812, %v1810
      %v1859 = vpack.c.b16 %v1815, %v1813
      %v1860 = vpack.c.b16 %v1816, %v1814
      %v1861 = vpack.c.b16 %v1819, %v1817
      %v1862 = vpack.c.b16 %v1820, %v1818
      %v1863 = vpack.c.b16 %v1823, %v1821
      %v1864 = vpack.c.b16 %v1824, %v1822
      %v1865 = vpack.c.b16 %v1827, %v1825
      %v1866 = vpack.c.b16 %v1828, %v1826
      %v1867 = vpack.c.b16 %v1831, %v1829
      %v1868 = vpack.c.b16 %v1832, %v1830
      %v1869 = vpack.c.b16 %v1835, %v1833
      %v1870 = vpack.c.b16 %v1836, %v1834
      %v1871 = vpack.c.b16 %v1839, %v1837
      %v1872 = vpack.c.b16 %v1840, %v1838
      %v1906 = vlaneseq
      %v1907 = vshrl.u32 %v1906, 7
      %v1908 = vsub.s32 0, %v1907
      %v1909 = vrot.slane %v1744, %v1908
      %v1910 = vlaneseq
      %v1911 = vshrl.u32 %v1910, 7
      %v1912 = vsub.s32 1, %v1911
      %v1913 = vrot.slane %v1744, %v1912
      %1916 = vmatprep.subr.bf16.mxu0 %v1856
      %1917 = vmatpush1.bf16.msra.mxu0 %v1855
      %1918 = vmatprep.subr.bf16.mxu0 %v1854
      %1919 = vmatpush1.bf16.msra.mxu0 %v1853
      %1920 = vmatprep.subr.bf16.mxu0 %v1852
      %1921 = vmatpush1.bf16.msra.mxu0 %v1851
      %1922 = vmatprep.subr.bf16.mxu0 %v1850
      %1923 = vmatpush1.bf16.msra.mxu0 %v1849
      %1924 = vmatprep.subr.bf16.mxu0 %v1848
      %1925 = vmatpush1.bf16.msra.mxu0 %v1847
      %1926 = vmatprep.subr.bf16.mxu0 %v1846
      %1927 = vmatpush1.bf16.msra.mxu0 %v1845
      %1928 = vmatprep.subr.bf16.mxu0 %v1844
      %1929 = vmatpush1.bf16.msra.mxu0 %v1843
      %1930 = vmatprep.subr.bf16.mxu0 %v1842
      %1931 = vmatpush1.bf16.msra.mxu0 %v1841
      %1932 = vmatprep.subr.bf16.mxu0 %v1872
      %1933 = vmatpush2.bf16.msra.mxu0 %v1871
      %1934 = vmatprep.subr.bf16.mxu0 %v1870
      %1935 = vmatpush2.bf16.msra.mxu0 %v1869
      %1936 = vmatprep.subr.bf16.mxu0 %v1868
      %1937 = vmatpush2.bf16.msra.mxu0 %v1867
      %1938 = vmatprep.subr.bf16.mxu0 %v1866
      %1939 = vmatpush2.bf16.msra.mxu0 %v1865
      %1940 = vmatprep.subr.bf16.mxu0 %v1864
      %1941 = vmatpush2.bf16.msra.mxu0 %v1863
      %1942 = vmatprep.subr.bf16.mxu0 %v1862
      %1943 = vmatpush2.bf16.msra.mxu0 %v1861
      %1944 = vmatprep.subr.bf16.mxu0 %v1860
      %1945 = vmatpush2.bf16.msra.mxu0 %v1859
      %1946 = vmatprep.subr.bf16.mxu0 %v1858
      %1947 = vmatpush2.bf16.msra.mxu0 %v1857
      %1948 = vmatprep.mubr.bf16.mxu0 %v1711
      %1949 = vmatmul.mubr.bf16.gmra.mxu0 %v1710
      %v1950 = vpop.f32.mrf.mxu0
      %v1951 = vadd.f32 %v1909, %v1950
      %v1952 = vpop.f32.mrf.mxu0
      %v1953 = vadd.f32 %v1913, %v1952
      %v1954 = vpop.f32.mrf.mxu0
      %v1955 = vpop.f32.mrf.mxu0
      %1956 = vdwg.mxu0
      %v1959 = vcombine.low %v1951, %v1953
      %v1961 = vunpack.c.l.s4 1966171168
      %v1962 = vunpack.c.0.s8 %v1961
      %v1963 = vlaneseq
      %v1964 = vshrl.u32 %v1963, 7
      %v1965 = vsub.s32 %v1962, %v1964
      %v1966 = vrot.slane %v1959, %v1965
      %v1968 = vunpack.c.l.s4 1966171168
      %v1969 = vunpack.c.0.s8 %v1968
      %v1970 = vlaneseq
      %v1971 = vshrl.u32 %v1970, 7
      %v1972 = vsub.s32 %v1969, %v1971
      %v1973 = vrot.slane %v1966, %v1972
      %v1975 = vlaneseq
      %vm1976 = vcmp.ge.s32.totalorder %v1975, 0
      %vm1977 = vcmp.lt.s32.totalorder %v1975, 256
      %vm1978 = vmand %vm1976, %vm1977
      %1979 = vst.msk [vmem:[%s276] sm:$0x3] %vm1978, %v1973
      %p1980 = scmp.lt.s32.totalorder %s18, 1
      %s1981 = scalar_select %p1980, %s18, 1
      %s1982 = smul.addr %s1981, 2
      %s1983 = scalar_lea.vmem %s7, %s1982
      // Predicated region
      $region49: #{visual_stream.1} parent=47 // pred_check
        %p1984 = pneg %p188
      $region50: #{visual_stream.1} parent=47 // pred_check_branch
        %1986 = sbr.rel (%p1984) target = $region52
      $region51: #{visual_stream.1} parent=47 // pred_region
        _
      $region52: #{visual_stream.1} parent=47 // pred_fallthru
        _
    $region48: #{visual_stream.1} parent=5 // pred_fallthru
      _
    %p1987 = scmp.le.s32.totalorder 2, %s13
    // Predicated region
    $region53: #{visual_stream.1} parent=5 // pred_check
      %p1988 = pneg %p1987
    $region54: #{visual_stream.1} parent=5 // pred_check_branch
      %1990 = sbr.rel (%p1988) target = $region56
    $region55: #{visual_stream.1} parent=5 // pred_region
      %s1991 = ssub.s32 %s13, 2
      // Predicated region
      $region57: #{visual_stream.1} parent=55 // pred_check
        %p1992 = pneg %p194
      $region58: #{visual_stream.1} parent=55 // pred_check_branch
        %1994 = sbr.rel (%p1992) target = $region60
      $region59: #{visual_stream.1} parent=55 // pred_region
        %p1995 = scmp.lt.s32.totalorder %s19, 1
        %s1996 = scalar_select %p1995, %s19, 1
        %s1997 = smul.addr %s1996, 2
        %s1998 = scalar_lea.vmem %s7, %s1997
      $region60: #{visual_stream.1} parent=55 // pred_fallthru
        _
    $region56: #{visual_stream.1} parent=5 // pred_fallthru
      _
  $region6: #{visual_stream.1} parent=0 // loop_footer
    %s17 = sadd.s32 1, %s13
  $region7: #{visual_stream.1} parent=0 // loop_footer_branch
    %12 = sbr.rel target = $region3
  $region8: #{visual_stream.1} parent=0 // loop_exit
    _

</llo_original>
